<compile_context>
chip_gen: v7x
topology: tpu7x:2x2x1
jax: 0.10.0
libtpu: 0.0.40
codegen_flags: <defaults>
</compile_context>

<pallas_src>
import jax
import jax.numpy as jnp
import numpy as np
from jax.experimental import pallas as pl
from jax.experimental.pallas import tpu as pltpu

_EPS = 1e-5


def _make_preact_kernel(H, NHW):
    inv_nhw = 1.0 / float(NHW)

    def kernel(x_ref, fb_ref, g1_ref, b1_ref, w1_ref, g2_ref, b2_ref, w2_ref,
               out_ref):
        # x_ref/out_ref: (H, L) with L = N*W*C (lane-dense slab)
        # fb_ref: (L, L) 0/1 channel-fold matrix
        # w*_ref: (3, L, L) block-banded conv weights (one band per kernel row)
        # g*/b*_ref: (1, L) per-lane (= per-channel, tiled) BN scale / shift
        x = x_ref[...]
        fb = fb_ref[...]

        # Tiny row-shift matrices: (s_up @ t)[h] = t[h-1] (0 at h=0),
        # (s_dn @ t)[h] = t[h+1] (0 at h=H-1).  Built once from iota.
        row = jax.lax.broadcasted_iota(jnp.int32, (H, H), 0)
        col = jax.lax.broadcasted_iota(jnp.int32, (H, H), 1)
        s_up = (col == row - 1).astype(jnp.float32)
        s_dn = (col == row + 1).astype(jnp.float32)

        def bn_relu_train(t, g, b):
            # t @ fb sums every lane of the same channel within a row and
            # broadcasts the result back to all lanes; the sublane sum then
            # finishes the reduction over H.  mean/var arrive already tiled
            # across the L lanes (no narrow (NHW, C) reductions).
            mean = jnp.sum(jnp.dot(t, fb, preferred_element_type=jnp.float32),
                           axis=0, keepdims=True) * inv_nhw
            cen = t - mean
            var = jnp.sum(jnp.dot(cen * cen, fb,
                                  preferred_element_type=jnp.float32),
                          axis=0, keepdims=True) * inv_nhw
            return jnp.maximum(cen * (g * jax.lax.rsqrt(var + _EPS)) + b, 0.0)

        def conv3x3(t, w3_ref, acc):
            # One MXU matmul per kernel row; dw taps + width zero-padding are
            # baked into the banded weights, dh taps are row-shift matmuls.
            up = jnp.dot(s_up, t, preferred_element_type=jnp.float32)
            dn = jnp.dot(s_dn, t, preferred_element_type=jnp.float32)
            acc = acc + jnp.dot(up, w3_ref[0], preferred_element_type=jnp.float32)
            acc = acc + jnp.dot(t, w3_ref[1], preferred_element_type=jnp.float32)
            acc = acc + jnp.dot(dn, w3_ref[2], preferred_element_type=jnp.float32)
            return acc

        h1 = bn_relu_train(x, g1_ref[...], b1_ref[...])
        c1 = conv3x3(h1, w1_ref, jnp.zeros_like(x))
        h2 = bn_relu_train(c1, g2_ref[...], b2_ref[...])
        # Identity shortcut seeds the conv2 accumulator (no separate add pass).
        out_ref[...] = conv3x3(h2, w2_ref, x)

    return kernel


def _banded_conv_weights(w_oihw, n, w_dim):
    """PyTorch (Cout, Cin, 3, 3) conv weight -> (3, n*w*Cin, n*w*Cout) banded
    matrices so a 3x3 / stride-1 / pad-1 conv over an (H, n*w*Cin) slab becomes
    three matmuls (one per kernel row).  Block-diagonal over the batch lanes."""
    c_out, c_in, kh, kw = w_oihw.shape
    wk = jnp.transpose(w_oihw, (2, 3, 1, 0)).astype(jnp.float32)  # (kh, kw, ci, co)
    zero = jnp.zeros((c_in, c_out), jnp.float32)
    eye_n = jnp.eye(n, dtype=jnp.float32)
    bands = []
    for dh in range(kh):
        rows = []
        for wp in range(w_dim):                       # input width position
            cols = []
            for wo in range(w_dim):                   # output width position
                dw = wp - wo + 1
                cols.append(wk[dh, dw] if 0 <= dw < kw else zero)
            rows.append(jnp.concatenate(cols, axis=1))        # (ci, w*co)
        band = jnp.concatenate(rows, axis=0)                   # (w*ci, w*co)
        bands.append(jnp.kron(eye_n, band))                    # block-diag over n
    return jnp.stack(bands, axis=0)                            # (3, n*w*ci, n*w*co)


def _channel_fold_matrix(lanes, c):
    """0/1 matrix: (row sums @ fb)[lane] = sum over all lanes of that channel."""
    lane_c = jnp.arange(lanes) % c
    return (lane_c[:, None] == lane_c[None, :]).astype(jnp.float32)


def _tile_per_lane(v, n, w_dim):
    return jnp.tile(v.astype(jnp.float32), n * w_dim).reshape(1, -1)


def preact_block_forward(x_nchw, params):
    """PyTorch-compatible wrapper: NCHW in, NCHW out (fp32)."""
    x_nchw = x_nchw.astype(jnp.float32)
    n, c_in, h, w = x_nchw.shape
    c_out = params["conv1_w"].shape[0]
    assert c_in == c_out, "kernel implements the identity-shortcut configuration"
    lanes = n * w * c_in

    # Lane-dense slab: rows = h, lanes = (batch, width, channel).
    x_slab = jnp.transpose(x_nchw, (2, 0, 3, 1)).reshape(h, lanes)

    w1_b = _banded_conv_weights(params["conv1_w"], n, w)   # (3, lanes, lanes)
    w2_b = _banded_conv_weights(params["conv2_w"], n, w)
    fb = _channel_fold_matrix(lanes, c_in)                  # (lanes, lanes)
    g1 = _tile_per_lane(params["bn1_gamma"], n, w)
    b1 = _tile_per_lane(params["bn1_beta"], n, w)
    g2 = _tile_per_lane(params["bn2_gamma"], n, w)
    b2 = _tile_per_lane(params["bn2_beta"], n, w)

    vmem = pl.BlockSpec(memory_space=pltpu.MemorySpace.VMEM)
    out_slab = pl.pallas_call(
        _make_preact_kernel(h, n * h * w),
        out_shape=jax.ShapeDtypeStruct((h, lanes), jnp.float32),
        in_specs=[vmem] * 8,
        out_specs=vmem,
    )(x_slab, fb, g1, b1, w1_b, g2, b2, w2_b)

    # (h, n, w, c) -> NCHW
    return jnp.transpose(out_slab.reshape(h, n, w, c_out), (1, 3, 0, 2))


def preact_block_reference(x, params):
    """Pure-JAX reference matching the PyTorch forward (train-mode BN)."""
    def bn(t, g, b):
        mean = jnp.mean(t, axis=(0, 2, 3), keepdims=True)
        var = jnp.mean(jnp.square(t - mean), axis=(0, 2, 3), keepdims=True)
        return (t - mean) * jax.lax.rsqrt(var + _EPS) * g.reshape(1, -1, 1, 1) \
            + b.reshape(1, -1, 1, 1)

    def conv3x3(t, w):
        return jax.lax.conv_general_dilated(
            t, w, window_strides=(1, 1), padding=((1, 1), (1, 1)),
            dimension_numbers=("NCHW", "OIHW", "NCHW"),
            precision=jax.lax.Precision.HIGHEST)

    h = jax.nn.relu(bn(x, params["bn1_gamma"], params["bn1_beta"]))
    shortcut = x
    out = conv3x3(h, params["conv1_w"])
    out = conv3x3(jax.nn.relu(bn(out, params["bn2_gamma"], params["bn2_beta"])),
                  params["conv2_w"])
    return out + shortcut


if __name__ == "__main__":
    in_planes = planes = 4
    N, H, W = 2, 16, 16

    key = jax.random.PRNGKey(0)
    ks = jax.random.split(key, 7)
    x = jax.random.normal(ks[0], (N, in_planes, H, W), jnp.float32)

    params = {
        "bn1_gamma": 1.0 + 0.1 * jax.random.normal(ks[1], (in_planes,), jnp.float32),
        "bn1_beta": 0.1 * jax.random.normal(ks[2], (in_planes,), jnp.float32),
        "conv1_w": 0.2 * jax.random.normal(ks[3], (planes, in_planes, 3, 3), jnp.float32),
        "bn2_gamma": 1.0 + 0.1 * jax.random.normal(ks[4], (planes,), jnp.float32),
        "bn2_beta": 0.1 * jax.random.normal(ks[5], (planes,), jnp.float32),
        "conv2_w": 0.2 * jax.random.normal(ks[6], (planes, planes, 3, 3), jnp.float32),
    }

    out = jax.block_until_ready(preact_block_forward(x, params))
    ref = jax.block_until_ready(preact_block_reference(x, params))

    assert out.shape == (N, planes, H, W), out.shape
    # Kernel matmuls run at default (bf16-pass) MXU precision per the perf
    # review; the reference uses Precision.HIGHEST, hence the 1e-2 tolerance.
    np.testing.assert_allclose(np.asarray(out), np.asarray(ref), rtol=1e-2, atol=1e-2)
    print("KERNEL_OK")
</pallas_src>

<mosaic_0001>
module attributes {stable_mosaic.version = 11 : i64} {
  func.func @kernel(%arg0: memref<16x128xf32, #tpu.memory_space<vmem>>, %arg1: memref<128x128xf32, #tpu.memory_space<vmem>>, %arg2: memref<1x128xf32, #tpu.memory_space<vmem>>, %arg3: memref<1x128xf32, #tpu.memory_space<vmem>>, %arg4: memref<3x128x128xf32, #tpu.memory_space<vmem>>, %arg5: memref<1x128xf32, #tpu.memory_space<vmem>>, %arg6: memref<1x128xf32, #tpu.memory_space<vmem>>, %arg7: memref<3x128x128xf32, #tpu.memory_space<vmem>>, %arg8: memref<16x128xf32, #tpu.memory_space<vmem>>) attributes {dimension_semantics = [], scalar_prefetch = 0 : i64, scratch_operands = 0 : i64, tpu.core_type = #tpu.core_type<tc>} {
    %c0 = arith.constant 0 : index
    %c0_0 = arith.constant 0 : index
    %0 = vector.load %arg0[%c0, %c0_0] : memref<16x128xf32, #tpu.memory_space<vmem>>, vector<16x128xf32>
    %c0_1 = arith.constant 0 : index
    %c0_2 = arith.constant 0 : index
    %1 = vector.load %arg1[%c0_1, %c0_2] : memref<128x128xf32, #tpu.memory_space<vmem>>, vector<128x128xf32>
    %2 = tpu.iota {dimensions = array<i32: 0>} : vector<16x16xi32>
    %3 = tpu.iota {dimensions = array<i32: 1>} : vector<16x16xi32>
    %c1_i32 = arith.constant 1 : i32
    %4 = vector.broadcast %c1_i32 : i32 to vector<16x16xi32>
    %5 = arith.subi %2, %4 : vector<16x16xi32>
    %6 = arith.cmpi eq, %3, %5 : vector<16x16xi32>
    %7 = arith.extui %6 : vector<16x16xi1> to vector<16x16xi32>
    %8 = arith.sitofp %7 : vector<16x16xi32> to vector<16x16xf32>
    %c1_i32_3 = arith.constant 1 : i32
    %9 = vector.broadcast %c1_i32_3 : i32 to vector<16x16xi32>
    %10 = arith.addi %2, %9 : vector<16x16xi32>
    %11 = arith.cmpi eq, %3, %10 : vector<16x16xi32>
    %12 = arith.extui %11 : vector<16x16xi1> to vector<16x16xi32>
    %13 = arith.sitofp %12 : vector<16x16xi32> to vector<16x16xf32>
    %c0_4 = arith.constant 0 : index
    %c0_5 = arith.constant 0 : index
    %14 = vector.load %arg2[%c0_4, %c0_5] : memref<1x128xf32, #tpu.memory_space<vmem>>, vector<1x128xf32>
    %c0_6 = arith.constant 0 : index
    %c0_7 = arith.constant 0 : index
    %15 = vector.load %arg3[%c0_6, %c0_7] : memref<1x128xf32, #tpu.memory_space<vmem>>, vector<1x128xf32>
    %cst = arith.constant dense<0.000000e+00> : vector<16x128xf32>
    %16 = tpu.matmul %0, %1, %cst {dimension_numbers = #tpu.dot_dimension_numbers<[1], [0], [0], [1], [0, 0, 1, 1], [], []>} : vector<16x128xf32>, vector<128x128xf32>, vector<16x128xf32> -> vector<16x128xf32>
    %cst_8 = arith.constant dense<0.000000e+00> : vector<128xf32>
    %17 = vector.multi_reduction <add>, %16, %cst_8 [0] : vector<16x128xf32> to vector<128xf32>
    %18 = vector.shape_cast %17 : vector<128xf32> to vector<1x128xf32>
    %cst_9 = arith.constant 0.001953125 : f32
    %19 = vector.broadcast %cst_9 : f32 to vector<1x128xf32>
    %20 = arith.mulf %18, %19 : vector<1x128xf32>
    %21 = vector.broadcast %20 : vector<1x128xf32> to vector<16x128xf32>
    %22 = arith.subf %0, %21 : vector<16x128xf32>
    %23 = arith.mulf %22, %22 : vector<16x128xf32>
    %cst_10 = arith.constant dense<0.000000e+00> : vector<16x128xf32>
    %24 = tpu.matmul %23, %1, %cst_10 {dimension_numbers = #tpu.dot_dimension_numbers<[1], [0], [0], [1], [0, 0, 1, 1], [], []>} : vector<16x128xf32>, vector<128x128xf32>, vector<16x128xf32> -> vector<16x128xf32>
    %cst_11 = arith.constant dense<0.000000e+00> : vector<128xf32>
    %25 = vector.multi_reduction <add>, %24, %cst_11 [0] : vector<16x128xf32> to vector<128xf32>
    %26 = vector.shape_cast %25 : vector<128xf32> to vector<1x128xf32>
    %cst_12 = arith.constant 0.001953125 : f32
    %27 = vector.broadcast %cst_12 : f32 to vector<1x128xf32>
    %28 = arith.mulf %26, %27 : vector<1x128xf32>
    %cst_13 = arith.constant 9.99999974E-6 : f32
    %29 = vector.broadcast %cst_13 : f32 to vector<1x128xf32>
    %30 = arith.addf %28, %29 : vector<1x128xf32>
    %31 = math.rsqrt %30 : vector<1x128xf32>
    %32 = arith.mulf %14, %31 : vector<1x128xf32>
    %33 = vector.broadcast %32 : vector<1x128xf32> to vector<16x128xf32>
    %34 = arith.mulf %22, %33 : vector<16x128xf32>
    %35 = vector.broadcast %15 : vector<1x128xf32> to vector<16x128xf32>
    %36 = arith.addf %34, %35 : vector<16x128xf32>
    %cst_14 = arith.constant 0.000000e+00 : f32
    %37 = vector.broadcast %cst_14 : f32 to vector<16x128xf32>
    %38 = arith.maximumf %36, %37 : vector<16x128xf32>
    %cst_15 = arith.constant 0.000000e+00 : f32
    %39 = vector.broadcast %cst_15 : f32 to vector<16x128xf32>
    %cst_16 = arith.constant dense<0.000000e+00> : vector<16x128xf32>
    %40 = tpu.matmul %8, %38, %cst_16 {dimension_numbers = #tpu.dot_dimension_numbers<[1], [0], [0], [1], [0, 0, 1, 1], [], []>} : vector<16x16xf32>, vector<16x128xf32>, vector<16x128xf32> -> vector<16x128xf32>
    %cst_17 = arith.constant dense<0.000000e+00> : vector<16x128xf32>
    %41 = tpu.matmul %13, %38, %cst_17 {dimension_numbers = #tpu.dot_dimension_numbers<[1], [0], [0], [1], [0, 0, 1, 1], [], []>} : vector<16x16xf32>, vector<16x128xf32>, vector<16x128xf32> -> vector<16x128xf32>
    %c0_18 = arith.constant 0 : index
    %c0_19 = arith.constant 0 : index
    %c0_20 = arith.constant 0 : index
    %42 = vector.load %arg4[%c0_18, %c0_19, %c0_20] : memref<3x128x128xf32, #tpu.memory_space<vmem>>, vector<1x128x128xf32>
    %43 = vector.shape_cast %42 : vector<1x128x128xf32> to vector<128x128xf32>
    %cst_21 = arith.constant dense<0.000000e+00> : vector<16x128xf32>
    %44 = tpu.matmul %40, %43, %cst_21 {dimension_numbers = #tpu.dot_dimension_numbers<[1], [0], [0], [1], [0, 0, 1, 1], [], []>} : vector<16x128xf32>, vector<128x128xf32>, vector<16x128xf32> -> vector<16x128xf32>
    %45 = arith.addf %39, %44 : vector<16x128xf32>
    %c1 = arith.constant 1 : index
    %c0_22 = arith.constant 0 : index
    %c0_23 = arith.constant 0 : index
    %46 = vector.load %arg4[%c1, %c0_22, %c0_23] : memref<3x128x128xf32, #tpu.memory_space<vmem>>, vector<1x128x128xf32>
    %47 = vector.shape_cast %46 : vector<1x128x128xf32> to vector<128x128xf32>
    %cst_24 = arith.constant dense<0.000000e+00> : vector<16x128xf32>
    %48 = tpu.matmul %38, %47, %cst_24 {dimension_numbers = #tpu.dot_dimension_numbers<[1], [0], [0], [1], [0, 0, 1, 1], [], []>} : vector<16x128xf32>, vector<128x128xf32>, vector<16x128xf32> -> vector<16x128xf32>
    %49 = arith.addf %45, %48 : vector<16x128xf32>
    %c2 = arith.constant 2 : index
    %c0_25 = arith.constant 0 : index
    %c0_26 = arith.constant 0 : index
    %50 = vector.load %arg4[%c2, %c0_25, %c0_26] : memref<3x128x128xf32, #tpu.memory_space<vmem>>, vector<1x128x128xf32>
    %51 = vector.shape_cast %50 : vector<1x128x128xf32> to vector<128x128xf32>
    %cst_27 = arith.constant dense<0.000000e+00> : vector<16x128xf32>
    %52 = tpu.matmul %41, %51, %cst_27 {dimension_numbers = #tpu.dot_dimension_numbers<[1], [0], [0], [1], [0, 0, 1, 1], [], []>} : vector<16x128xf32>, vector<128x128xf32>, vector<16x128xf32> -> vector<16x128xf32>
    %53 = arith.addf %49, %52 : vector<16x128xf32>
    %c0_28 = arith.constant 0 : index
    %c0_29 = arith.constant 0 : index
    %54 = vector.load %arg5[%c0_28, %c0_29] : memref<1x128xf32, #tpu.memory_space<vmem>>, vector<1x128xf32>
    %c0_30 = arith.constant 0 : index
    %c0_31 = arith.constant 0 : index
    %55 = vector.load %arg6[%c0_30, %c0_31] : memref<1x128xf32, #tpu.memory_space<vmem>>, vector<1x128xf32>
    %cst_32 = arith.constant dense<0.000000e+00> : vector<16x128xf32>
    %56 = tpu.matmul %53, %1, %cst_32 {dimension_numbers = #tpu.dot_dimension_numbers<[1], [0], [0], [1], [0, 0, 1, 1], [], []>} : vector<16x128xf32>, vector<128x128xf32>, vector<16x128xf32> -> vector<16x128xf32>
    %cst_33 = arith.constant dense<0.000000e+00> : vector<128xf32>
    %57 = vector.multi_reduction <add>, %56, %cst_33 [0] : vector<16x128xf32> to vector<128xf32>
    %58 = vector.shape_cast %57 : vector<128xf32> to vector<1x128xf32>
    %cst_34 = arith.constant 0.001953125 : f32
    %59 = vector.broadcast %cst_34 : f32 to vector<1x128xf32>
    %60 = arith.mulf %58, %59 : vector<1x128xf32>
    %61 = vector.broadcast %60 : vector<1x128xf32> to vector<16x128xf32>
    %62 = arith.subf %53, %61 : vector<16x128xf32>
    %63 = arith.mulf %62, %62 : vector<16x128xf32>
    %cst_35 = arith.constant dense<0.000000e+00> : vector<16x128xf32>
    %64 = tpu.matmul %63, %1, %cst_35 {dimension_numbers = #tpu.dot_dimension_numbers<[1], [0], [0], [1], [0, 0, 1, 1], [], []>} : vector<16x128xf32>, vector<128x128xf32>, vector<16x128xf32> -> vector<16x128xf32>
    %cst_36 = arith.constant dense<0.000000e+00> : vector<128xf32>
    %65 = vector.multi_reduction <add>, %64, %cst_36 [0] : vector<16x128xf32> to vector<128xf32>
    %66 = vector.shape_cast %65 : vector<128xf32> to vector<1x128xf32>
    %cst_37 = arith.constant 0.001953125 : f32
    %67 = vector.broadcast %cst_37 : f32 to vector<1x128xf32>
    %68 = arith.mulf %66, %67 : vector<1x128xf32>
    %cst_38 = arith.constant 9.99999974E-6 : f32
    %69 = vector.broadcast %cst_38 : f32 to vector<1x128xf32>
    %70 = arith.addf %68, %69 : vector<1x128xf32>
    %71 = math.rsqrt %70 : vector<1x128xf32>
    %72 = arith.mulf %54, %71 : vector<1x128xf32>
    %73 = vector.broadcast %72 : vector<1x128xf32> to vector<16x128xf32>
    %74 = arith.mulf %62, %73 : vector<16x128xf32>
    %75 = vector.broadcast %55 : vector<1x128xf32> to vector<16x128xf32>
    %76 = arith.addf %74, %75 : vector<16x128xf32>
    %cst_39 = arith.constant 0.000000e+00 : f32
    %77 = vector.broadcast %cst_39 : f32 to vector<16x128xf32>
    %78 = arith.maximumf %76, %77 : vector<16x128xf32>
    %cst_40 = arith.constant dense<0.000000e+00> : vector<16x128xf32>
    %79 = tpu.matmul %8, %78, %cst_40 {dimension_numbers = #tpu.dot_dimension_numbers<[1], [0], [0], [1], [0, 0, 1, 1], [], []>} : vector<16x16xf32>, vector<16x128xf32>, vector<16x128xf32> -> vector<16x128xf32>
    %cst_41 = arith.constant dense<0.000000e+00> : vector<16x128xf32>
    %80 = tpu.matmul %13, %78, %cst_41 {dimension_numbers = #tpu.dot_dimension_numbers<[1], [0], [0], [1], [0, 0, 1, 1], [], []>} : vector<16x16xf32>, vector<16x128xf32>, vector<16x128xf32> -> vector<16x128xf32>
    %c0_42 = arith.constant 0 : index
    %c0_43 = arith.constant 0 : index
    %c0_44 = arith.constant 0 : index
    %81 = vector.load %arg7[%c0_42, %c0_43, %c0_44] : memref<3x128x128xf32, #tpu.memory_space<vmem>>, vector<1x128x128xf32>
    %82 = vector.shape_cast %81 : vector<1x128x128xf32> to vector<128x128xf32>
    %cst_45 = arith.constant dense<0.000000e+00> : vector<16x128xf32>
    %83 = tpu.matmul %79, %82, %cst_45 {dimension_numbers = #tpu.dot_dimension_numbers<[1], [0], [0], [1], [0, 0, 1, 1], [], []>} : vector<16x128xf32>, vector<128x128xf32>, vector<16x128xf32> -> vector<16x128xf32>
    %84 = arith.addf %0, %83 : vector<16x128xf32>
    %c1_46 = arith.constant 1 : index
    %c0_47 = arith.constant 0 : index
    %c0_48 = arith.constant 0 : index
    %85 = vector.load %arg7[%c1_46, %c0_47, %c0_48] : memref<3x128x128xf32, #tpu.memory_space<vmem>>, vector<1x128x128xf32>
    %86 = vector.shape_cast %85 : vector<1x128x128xf32> to vector<128x128xf32>
    %cst_49 = arith.constant dense<0.000000e+00> : vector<16x128xf32>
    %87 = tpu.matmul %78, %86, %cst_49 {dimension_numbers = #tpu.dot_dimension_numbers<[1], [0], [0], [1], [0, 0, 1, 1], [], []>} : vector<16x128xf32>, vector<128x128xf32>, vector<16x128xf32> -> vector<16x128xf32>
    %88 = arith.addf %84, %87 : vector<16x128xf32>
    %c2_50 = arith.constant 2 : index
    %c0_51 = arith.constant 0 : index
    %c0_52 = arith.constant 0 : index
    %89 = vector.load %arg7[%c2_50, %c0_51, %c0_52] : memref<3x128x128xf32, #tpu.memory_space<vmem>>, vector<1x128x128xf32>
    %90 = vector.shape_cast %89 : vector<1x128x128xf32> to vector<128x128xf32>
    %cst_53 = arith.constant dense<0.000000e+00> : vector<16x128xf32>
    %91 = tpu.matmul %80, %90, %cst_53 {dimension_numbers = #tpu.dot_dimension_numbers<[1], [0], [0], [1], [0, 0, 1, 1], [], []>} : vector<16x128xf32>, vector<128x128xf32>, vector<16x128xf32> -> vector<16x128xf32>
    %92 = arith.addf %88, %91 : vector<16x128xf32>
    %c0_54 = arith.constant 0 : index
    %c0_55 = arith.constant 0 : index
    %93 = vector.load %arg8[%c0_54, %c0_55] : memref<16x128xf32, #tpu.memory_space<vmem>>, vector<16x128xf32>
    tpu.vector_store %arg8[%c0_54, %c0_55], %92 {strides = array<i32>} : memref<16x128xf32, #tpu.memory_space<vmem>>, vector<16x128xf32>,
    return
  }
}

</mosaic_0001>

<llo_original>
// kernel: tpu_custom_call.1
$region0: #{tpu_custom_call.1}
  #allocation0 [shape = 'u32[]', space=smem, size = 0x4, offset = 0x4, fixed_abs, tag = 'smem constant byte address 0x4 - core index']
  #allocation1 [shape = 'u32[144,128]{1,0:T(1,128)}', space=vmem, size = 0x12000, scoped, tag = 'internal scratch']
  %s0 = inlined_call_operand.hbm [shape: f32[16,128], index: 0, kind: input, shape index: {}]
  %s1 = inlined_call_operand.hbm [shape: f32[128,128], index: 1, kind: input, shape index: {}]
  %s2 = inlined_call_operand.vmem [shape: f32[1,128], index: 2, kind: input, shape index: {}]
  %s3 = inlined_call_operand.vmem [shape: f32[1,128], index: 3, kind: input, shape index: {}]
  %s4 = inlined_call_operand.hbm [shape: f32[3,128,128], index: 4, kind: input, shape index: {}]
  %s5 = inlined_call_operand.vmem [shape: f32[1,128], index: 5, kind: input, shape index: {}]
  %s6 = inlined_call_operand.vmem [shape: f32[1,128], index: 6, kind: input, shape index: {}]
  %s7 = inlined_call_operand.hbm [shape: f32[3,128,128], index: 7, kind: input, shape index: {}]
  %s8 = inlined_call_operand.hbm [shape: f32[16,128], index: 8, kind: output, shape index: {}]
  %s9 = sld [smem:[#allocation0]]
  $region58: #{tpu_custom_call.1} parent=0
    _
  %s11 = ssub.s32 1, %s9
  %s12 = scalar_select 0, %s11, %s9
  $region1: #{tpu_custom_call.1} parent=0
    #allocation2 [shape = 'u8[8192]{0}', space=vmem, size = 0x2000, scoped, tag = 'input window, operand 0, single buffered']
    #allocation3 [shape = 's32[1]{0}', space=sflag, size = 0x4, scoped, tag = 'scoped memory for tpu_custom_call.1']
    #allocation4 [shape = 's32[1]{0}', space=sflag, size = 0x4, scoped, tag = 'scoped memory for tpu_custom_call.1']
    #allocation5 [shape = 'u8[65536]{0}', space=vmem, size = 0x10000, scoped, tag = 'input window, operand 1, single buffered']
    #allocation6 [shape = 's32[1]{0}', space=sflag, size = 0x4, scoped, tag = 'scoped memory for tpu_custom_call.1']
    #allocation7 [shape = 'u8[196608]{0}', space=vmem, size = 0x30000, scoped, tag = 'input window, operand 4, single buffered']
    #allocation8 [shape = 'u8[196608]{0}', space=vmem, size = 0x30000, scoped, tag = 'input window, operand 7, single buffered']
    #allocation9 [shape = 's32[1]{0}', space=sflag, size = 0x4, scoped, tag = 'scoped memory for tpu_custom_call.1']
    #allocation10 [shape = 'u8[8192]{0}', space=vmem, size = 0x2000, scoped, tag = 'output window, operand 0, single buffered']
    %13 = vsyncpa [#allocation3], 0
    %14 = vsyncpa [#allocation6], 0
    %15 = vsyncpa [#allocation9], 0
    %16 = vsyncpa [#allocation4], 0
    // Predicated region
    $region2: #{tpu_custom_call.1} parent=1 // pred_check
      _
    $region3: #{tpu_custom_call.1} parent=1 // pred_check_branch
      %18 = sbr.rel (0) target = $region5
    $region4: #{tpu_custom_call.1} parent=1 // pred_region
      %s20 = ssub.s32 256, 256
      %21 = vsyncadd [#allocation3], %s20
      %s22 = sshll.u32 [#allocation2], 4
      %s23 = int_to_ptr.vmem [resolvable:$true] %s22
      %28 = dma.hbm_to_vmem [thread:$0]  %s0, 256, %s23, [#allocation3], 128, 128, 8
    $region5: #{tpu_custom_call.1} parent=1 // pred_fallthru
      _
    // Predicated region
    $region6: #{tpu_custom_call.1} parent=1 // pred_check
      _
    $region7: #{tpu_custom_call.1} parent=1 // pred_check_branch
      %30 = sbr.rel (0) target = $region9
    $region8: #{tpu_custom_call.1} parent=1 // pred_region
      %s32 = ssub.s32 2048, 2048
      %33 = vsyncadd [#allocation6], %s32
      %s34 = sshll.u32 [#allocation5], 4
      %s35 = int_to_ptr.vmem [resolvable:$true] %s34
      %40 = dma.hbm_to_vmem [thread:$0]  %s1, 2048, %s35, [#allocation6], 128, 128, 8
    $region9: #{tpu_custom_call.1} parent=1 // pred_fallthru
      _
    // Predicated region
    $region10: #{tpu_custom_call.1} parent=1 // pred_check
      _
    $region11: #{tpu_custom_call.1} parent=1 // pred_check_branch
      %42 = sbr.rel (0) target = $region13
    $region12: #{tpu_custom_call.1} parent=1 // pred_region
      _
    $region13: #{tpu_custom_call.1} parent=1 // pred_fallthru
      _
    // Predicated region
    $region14: #{tpu_custom_call.1} parent=1 // pred_check
      _
    $region15: #{tpu_custom_call.1} parent=1 // pred_check_branch
      %44 = sbr.rel (0) target = $region17
    $region16: #{tpu_custom_call.1} parent=1 // pred_region
      _
    $region17: #{tpu_custom_call.1} parent=1 // pred_fallthru
      _
    // Predicated region
    $region18: #{tpu_custom_call.1} parent=1 // pred_check
      _
    $region19: #{tpu_custom_call.1} parent=1 // pred_check_branch
      %46 = sbr.rel (0) target = $region21
    $region20: #{tpu_custom_call.1} parent=1 // pred_region
      %s48 = ssub.s32 6144, 6144
      %49 = vsyncadd [#allocation6], %s48
      %s50 = sshll.u32 [#allocation7], 4
      %s51 = int_to_ptr.vmem [resolvable:$true] %s50
      %56 = dma.hbm_to_vmem [thread:$0]  %s4, 6144, %s51, [#allocation6], 128, 128, 8
    $region21: #{tpu_custom_call.1} parent=1 // pred_fallthru
      _
    // Predicated region
    $region22: #{tpu_custom_call.1} parent=1 // pred_check
      _
    $region23: #{tpu_custom_call.1} parent=1 // pred_check_branch
      %58 = sbr.rel (0) target = $region25
    $region24: #{tpu_custom_call.1} parent=1 // pred_region
      _
    $region25: #{tpu_custom_call.1} parent=1 // pred_fallthru
      _
    // Predicated region
    $region26: #{tpu_custom_call.1} parent=1 // pred_check
      _
    $region27: #{tpu_custom_call.1} parent=1 // pred_check_branch
      %60 = sbr.rel (0) target = $region29
    $region28: #{tpu_custom_call.1} parent=1 // pred_region
      _
    $region29: #{tpu_custom_call.1} parent=1 // pred_fallthru
      _
    // Predicated region
    $region30: #{tpu_custom_call.1} parent=1 // pred_check
      _
    $region31: #{tpu_custom_call.1} parent=1 // pred_check_branch
      %62 = sbr.rel (0) target = $region33
    $region32: #{tpu_custom_call.1} parent=1 // pred_region
      %s64 = ssub.s32 6144, 6144
      %65 = vsyncadd [#allocation9], %s64
      %s66 = sshll.u32 [#allocation8], 4
      %s67 = int_to_ptr.vmem [resolvable:$true] %s66
      %72 = dma.hbm_to_vmem [thread:$0]  %s7, 6144, %s67, [#allocation9], 128, 128, 8
    $region33: #{tpu_custom_call.1} parent=1 // pred_fallthru
      _
    // Predicated region
    $region34: #{tpu_custom_call.1} parent=1 // pred_check
      _
    $region35: #{tpu_custom_call.1} parent=1 // pred_check_branch
      %74 = sbr.rel (0) target = $region37
    $region36: #{tpu_custom_call.1} parent=1 // pred_region
      %75 = dma.done [#allocation3], 256
    $region37: #{tpu_custom_call.1} parent=1 // pred_fallthru
      _
    // Predicated region
    $region38: #{tpu_custom_call.1} parent=1 // pred_check
      _
    $region39: #{tpu_custom_call.1} parent=1 // pred_check_branch
      %77 = sbr.rel (0) target = $region41
    $region40: #{tpu_custom_call.1} parent=1 // pred_region
      %78 = dma.done [#allocation6], 2048
    $region41: #{tpu_custom_call.1} parent=1 // pred_fallthru
      _
    // Predicated region
    $region42: #{tpu_custom_call.1} parent=1 // pred_check
      _
    $region43: #{tpu_custom_call.1} parent=1 // pred_check_branch
      %80 = sbr.rel (0) target = $region45
    $region44: #{tpu_custom_call.1} parent=1 // pred_region
      %81 = dma.done [#allocation6], 6144
    $region45: #{tpu_custom_call.1} parent=1 // pred_fallthru
      _
    // Predicated region
    $region46: #{tpu_custom_call.1} parent=1 // pred_check
      _
    $region47: #{tpu_custom_call.1} parent=1 // pred_check_branch
      %83 = sbr.rel (0) target = $region49
    $region48: #{tpu_custom_call.1} parent=1 // pred_region
      %84 = dma.done [#allocation9], 6144
    $region49: #{tpu_custom_call.1} parent=1 // pred_fallthru
      _
    %v85 = vld [vmem:[#allocation2] sm:$0xff]
    %v86 = vld [vmem:[#allocation2 + $0x8] sm:$0xff]
    %v87 = vld [vmem:[#allocation5] sm:$0xff]
    %v88 = vld [vmem:[#allocation5 + $0x8] sm:$0xff]
    %v89 = vld [vmem:[#allocation5 + $0x10] sm:$0xff]
    %v90 = vld [vmem:[#allocation5 + $0x18] sm:$0xff]
    %v91 = vld [vmem:[#allocation5 + $0x20] sm:$0xff]
    %v92 = vld [vmem:[#allocation5 + $0x28] sm:$0xff]
    %v93 = vld [vmem:[#allocation5 + $0x30] sm:$0xff]
    %v94 = vld [vmem:[#allocation5 + $0x38] sm:$0xff]
    %v95 = vld [vmem:[#allocation5 + $0x40] sm:$0xff]
    %v96 = vld [vmem:[#allocation5 + $0x48] sm:$0xff]
    %v97 = vld [vmem:[#allocation5 + $0x50] sm:$0xff]
    %v98 = vld [vmem:[#allocation5 + $0x58] sm:$0xff]
    %v99 = vld [vmem:[#allocation5 + $0x60] sm:$0xff]
    %v100 = vld [vmem:[#allocation5 + $0x68] sm:$0xff]
    %v101 = vld [vmem:[#allocation5 + $0x70] sm:$0xff]
    %v102 = vld [vmem:[#allocation5 + $0x78] sm:$0xff]
    %v103 = vlaneseq
    %v104 = vshrl.u32 %v103, 7
    %v105 = vadd.s32 %v104, 8
    %v106 = vlaneseq
    %v107 = vand.u32 %v106, 127
    %v108 = vsub.s32 %v104, 1
    %v109 = vsub.s32 %v105, 1
    %vm110 = vcmp.eq.s32.totalorder %v107, %v108
    %vm111 = vcmp.eq.s32.totalorder %v107, %v109
    %v112 = vsel %vm110, 1, 0
    %v113 = vsel %vm111, 1, 0
    %v114 = vcvt.s32.f32 %v112
    %v115 = vcvt.s32.f32 %v113
    %v116 = vadd.s32 %v104, 1
    %v117 = vadd.s32 %v105, 1
    %vm118 = vcmp.eq.s32.totalorder %v107, %v116
    %vm119 = vcmp.eq.s32.totalorder %v107, %v117
    %v120 = vsel %vm118, 1, 0
    %v121 = vsel %vm119, 1, 0
    %v122 = vcvt.s32.f32 %v120
    %v123 = vcvt.s32.f32 %v121
    %v124 = vld [vmem:[%s2] sm:$0x1]
    %v125 = vld [vmem:[%s3] sm:$0x1]
    %126 = vmatprep.subr.mxu0 0.0
    %127 = vmatpush1.msra.mxu0 %v87
    %128 = vmatprep.subr.mxu0 0.0
    %129 = vmatpush1.msra.mxu0 %v88
    %130 = vmatprep.subr.mxu0 0.0
    %131 = vmatpush1.msra.mxu0 %v89
    %132 = vmatprep.subr.mxu0 0.0
    %133 = vmatpush1.msra.mxu0 %v90
    %134 = vmatprep.subr.mxu0 0.0
    %135 = vmatpush1.msra.mxu0 %v91
    %136 = vmatprep.subr.mxu0 0.0
    %137 = vmatpush1.msra.mxu0 %v92
    %138 = vmatprep.subr.mxu0 0.0
    %139 = vmatpush1.msra.mxu0 %v93
    %140 = vmatprep.subr.mxu0 0.0
    %141 = vmatpush1.msra.mxu0 %v94
    %142 = vmatprep.subr.mxu0 0.0
    %143 = vmatpush1.msra.mxu0 %v95
    %144 = vmatprep.subr.mxu0 0.0
    %145 = vmatpush1.msra.mxu0 %v96
    %146 = vmatprep.subr.mxu0 0.0
    %147 = vmatpush1.msra.mxu0 %v97
    %148 = vmatprep.subr.mxu0 0.0
    %149 = vmatpush1.msra.mxu0 %v98
    %150 = vmatprep.subr.mxu0 0.0
    %151 = vmatpush1.msra.mxu0 %v99
    %152 = vmatprep.subr.mxu0 0.0
    %153 = vmatpush1.msra.mxu0 %v100
    %154 = vmatprep.subr.mxu0 0.0
    %155 = vmatpush1.msra.mxu0 %v101
    %156 = vmatprep.subr.mxu0 0.0
    %157 = vmatpush1.msra.mxu0 %v102
    %158 = vmatprep.subr.mxu0 0.0
    %159 = vmatpush1.msra.mxu0 0.0
    %160 = vmatprep.subr.mxu0 0.0
    %161 = vmatpush1.msra.mxu0 0.0
    %162 = vmatprep.subr.mxu0 0.0
    %163 = vmatpush1.msra.mxu0 0.0
    %164 = vmatprep.subr.mxu0 0.0
    %165 = vmatpush1.msra.mxu0 0.0
    %166 = vmatprep.subr.mxu0 0.0
    %167 = vmatpush1.msra.mxu0 0.0
    %168 = vmatprep.subr.mxu0 0.0
    %169 = vmatpush1.msra.mxu0 0.0
    %170 = vmatprep.subr.mxu0 0.0
    %171 = vmatpush1.msra.mxu0 0.0
    %172 = vmatprep.subr.mxu0 0.0
    %173 = vmatpush1.msra.mxu0 0.0
    %174 = vmatprep.subr.mxu0 0.0
    %175 = vmatpush1.msra.mxu0 0.0
    %176 = vmatprep.subr.mxu0 0.0
    %177 = vmatpush1.msra.mxu0 0.0
    %178 = vmatprep.subr.mxu0 0.0
    %179 = vmatpush1.msra.mxu0 0.0
    %180 = vmatprep.subr.mxu0 0.0
    %181 = vmatpush1.msra.mxu0 0.0
    %182 = vmatprep.subr.mxu0 0.0
    %183 = vmatpush1.msra.mxu0 0.0
    %184 = vmatprep.subr.mxu0 0.0
    %185 = vmatpush1.msra.mxu0 0.0
    %186 = vmatprep.subr.mxu0 0.0
    %187 = vmatpush1.msra.mxu0 0.0
    %188 = vmatprep.subr.mxu0 0.0
    %189 = vmatpush1.msra.mxu0 0.0
    %190 = vmatprep.mubr.f32.mxu0 0.0
    %191 = vmatmul.mubr.f32.gmra.mrb[0].mxu0 %v85
    %v192 = vpop.f32.mrb[0].mxu0
    %v193 = vadd.f32 0.0, %v192
    %v194 = vpop.f32.mrb[0].mxu0
    %195 = vmatprep.mubr.f32.mxu0 0.0
    %196 = vmatmul.mubr.f32.gmra.mrb[0].mxu0 %v86
    %v197 = vpop.f32.mrb[0].mxu0
    %v198 = vadd.f32 0.0, %v197
    %v199 = vpop.f32.mrb[0].mxu0
    %200 = vdwg.mxu0
    %v201 = vadd.f32 %v193, %v198
    %v202 = vrot.slane %v201, 4
    %v203 = vadd.f32 %v201, %v202
    %v204 = vrot.slane %v203, 2
    %v205 = vadd.f32 %v203, %v204
    %v206 = vrot.slane %v205, 1
    %v207 = vadd.f32 %v205, %v206
    %v208 = vmul.f32 %v207, 0.001953125
    %v209 = vsub.f32 %v85, %v208
    %v210 = vsub.f32 %v86, %v208
    %v211 = vmul.f32 %v209, %v209
    %v212 = vmul.f32 %v210, %v210
    %213 = vmatprep.subr.mxu0 0.0
    %214 = vmatpush1.msra.mxu0 %v87
    %215 = vmatprep.subr.mxu0 0.0
    %216 = vmatpush1.msra.mxu0 %v88
    %217 = vmatprep.subr.mxu0 0.0
    %218 = vmatpush1.msra.mxu0 %v89
    %219 = vmatprep.subr.mxu0 0.0
    %220 = vmatpush1.msra.mxu0 %v90
    %221 = vmatprep.subr.mxu0 0.0
    %222 = vmatpush1.msra.mxu0 %v91
    %223 = vmatprep.subr.mxu0 0.0
    %224 = vmatpush1.msra.mxu0 %v92
    %225 = vmatprep.subr.mxu0 0.0
    %226 = vmatpush1.msra.mxu0 %v93
    %227 = vmatprep.subr.mxu0 0.0
    %228 = vmatpush1.msra.mxu0 %v94
    %229 = vmatprep.subr.mxu0 0.0
    %230 = vmatpush1.msra.mxu0 %v95
    %231 = vmatprep.subr.mxu0 0.0
    %232 = vmatpush1.msra.mxu0 %v96
    %233 = vmatprep.subr.mxu0 0.0
    %234 = vmatpush1.msra.mxu0 %v97
    %235 = vmatprep.subr.mxu0 0.0
    %236 = vmatpush1.msra.mxu0 %v98
    %237 = vmatprep.subr.mxu0 0.0
    %238 = vmatpush1.msra.mxu0 %v99
    %239 = vmatprep.subr.mxu0 0.0
    %240 = vmatpush1.msra.mxu0 %v100
    %241 = vmatprep.subr.mxu0 0.0
    %242 = vmatpush1.msra.mxu0 %v101
    %243 = vmatprep.subr.mxu0 0.0
    %244 = vmatpush1.msra.mxu0 %v102
    %245 = vmatprep.subr.mxu0 0.0
    %246 = vmatpush1.msra.mxu0 0.0
    %247 = vmatprep.subr.mxu0 0.0
    %248 = vmatpush1.msra.mxu0 0.0
    %249 = vmatprep.subr.mxu0 0.0
    %250 = vmatpush1.msra.mxu0 0.0
    %251 = vmatprep.subr.mxu0 0.0
    %252 = vmatpush1.msra.mxu0 0.0
    %253 = vmatprep.subr.mxu0 0.0
    %254 = vmatpush1.msra.mxu0 0.0
    %255 = vmatprep.subr.mxu0 0.0
    %256 = vmatpush1.msra.mxu0 0.0
    %257 = vmatprep.subr.mxu0 0.0
    %258 = vmatpush1.msra.mxu0 0.0
    %259 = vmatprep.subr.mxu0 0.0
    %260 = vmatpush1.msra.mxu0 0.0
    %261 = vmatprep.subr.mxu0 0.0
    %262 = vmatpush1.msra.mxu0 0.0
    %263 = vmatprep.subr.mxu0 0.0
    %264 = vmatpush1.msra.mxu0 0.0
    %265 = vmatprep.subr.mxu0 0.0
    %266 = vmatpush1.msra.mxu0 0.0
    %267 = vmatprep.subr.mxu0 0.0
    %268 = vmatpush1.msra.mxu0 0.0
    %269 = vmatprep.subr.mxu0 0.0
    %270 = vmatpush1.msra.mxu0 0.0
    %271 = vmatprep.subr.mxu0 0.0
    %272 = vmatpush1.msra.mxu0 0.0
    %273 = vmatprep.subr.mxu0 0.0
    %274 = vmatpush1.msra.mxu0 0.0
    %275 = vmatprep.subr.mxu0 0.0
    %276 = vmatpush1.msra.mxu0 0.0
    %277 = vmatprep.mubr.f32.mxu0 0.0
    %278 = vmatmul.mubr.f32.gmra.mrb[0].mxu0 %v211
    %v279 = vpop.f32.mrb[0].mxu0
    %v280 = vadd.f32 0.0, %v279
    %v281 = vpop.f32.mrb[0].mxu0
    %282 = vmatprep.mubr.f32.mxu0 0.0
    %283 = vmatmul.mubr.f32.gmra.mrb[0].mxu0 %v212
    %v284 = vpop.f32.mrb[0].mxu0
    %v285 = vadd.f32 0.0, %v284
    %v286 = vpop.f32.mrb[0].mxu0
    %287 = vdwg.mxu0
    %v288 = vadd.f32 %v280, %v285
    %v289 = vrot.slane %v288, 4
    %v290 = vadd.f32 %v288, %v289
    %v291 = vrot.slane %v290, 2
    %v292 = vadd.f32 %v290, %v291
    %v293 = vrot.slane %v292, 1
    %v294 = vadd.f32 %v292, %v293
    %v295 = vmul.f32 %v294, 0.001953125
    %v296 = vadd.f32 %v295, 1e-05
    %v297 = vrsqrt.pop %v296
    %v298 = vmul.f32 %v124, %v297
    %v300 = vlaneseq
    %v301 = vshrl.u32 %v300, 7
    %v302 = vsub.s32 0, %v301
    %v303 = vrot.slane %v298, %v302
    %v305 = vmul.f32 %v209, %v303
    %v306 = vmul.f32 %v210, %v303
    %v308 = vlaneseq
    %v309 = vshrl.u32 %v308, 7
    %v310 = vsub.s32 0, %v309
    %v311 = vrot.slane %v125, %v310
    %v313 = vadd.f32 %v305, %v311
    %v314 = vadd.f32 %v306, %v311
    %v315 = vmax.f32 %v313, 0.0
    %v316 = vmax.f32 %v314, 0.0
    %vm317 = vcmask 130048
    %v319 = vsel %vm317, %v114, 0
    %v322 = vsel %vm317, %v115, 0
    %324 = vmatprep.subr.mxu0 0.0
    %325 = vmatpush1.msra.mxu0 %v315
    %326 = vmatprep.subr.mxu0 0.0
    %327 = vmatpush1.msra.mxu0 %v316
    %328 = vmatprep.subr.mxu0 0.0
    %329 = vmatpush1.msra.mxu0 0.0
    %330 = vmatprep.subr.mxu0 0.0
    %331 = vmatpush1.msra.mxu0 0.0
    %332 = vmatprep.subr.mxu0 0.0
    %333 = vmatpush1.msra.mxu0 0.0
    %334 = vmatprep.subr.mxu0 0.0
    %335 = vmatpush1.msra.mxu0 0.0
    %336 = vmatprep.subr.mxu0 0.0
    %337 = vmatpush1.msra.mxu0 0.0
    %338 = vmatprep.subr.mxu0 0.0
    %339 = vmatpush1.msra.mxu0 0.0
    %340 = vmatprep.subr.mxu0 0.0
    %341 = vmatpush1.msra.mxu0 0.0
    %342 = vmatprep.subr.mxu0 0.0
    %343 = vmatpush1.msra.mxu0 0.0
    %344 = vmatprep.subr.mxu0 0.0
    %345 = vmatpush1.msra.mxu0 0.0
    %346 = vmatprep.subr.mxu0 0.0
    %347 = vmatpush1.msra.mxu0 0.0
    %348 = vmatprep.subr.mxu0 0.0
    %349 = vmatpush1.msra.mxu0 0.0
    %350 = vmatprep.subr.mxu0 0.0
    %351 = vmatpush1.msra.mxu0 0.0
    %352 = vmatprep.subr.mxu0 0.0
    %353 = vmatpush1.msra.mxu0 0.0
    %354 = vmatprep.subr.mxu0 0.0
    %355 = vmatpush1.msra.mxu0 0.0
    %356 = vmatprep.subr.mxu0 0.0
    %357 = vmatpush1.msra.mxu0 0.0
    %358 = vmatprep.subr.mxu0 0.0
    %359 = vmatpush1.msra.mxu0 0.0
    %360 = vmatprep.subr.mxu0 0.0
    %361 = vmatpush1.msra.mxu0 0.0
    %362 = vmatprep.subr.mxu0 0.0
    %363 = vmatpush1.msra.mxu0 0.0
    %364 = vmatprep.subr.mxu0 0.0
    %365 = vmatpush1.msra.mxu0 0.0
    %366 = vmatprep.subr.mxu0 0.0
    %367 = vmatpush1.msra.mxu0 0.0
    %368 = vmatprep.subr.mxu0 0.0
    %369 = vmatpush1.msra.mxu0 0.0
    %370 = vmatprep.subr.mxu0 0.0
    %371 = vmatpush1.msra.mxu0 0.0
    %372 = vmatprep.subr.mxu0 0.0
    %373 = vmatpush1.msra.mxu0 0.0
    %374 = vmatprep.subr.mxu0 0.0
    %375 = vmatpush1.msra.mxu0 0.0
    %376 = vmatprep.subr.mxu0 0.0
    %377 = vmatpush1.msra.mxu0 0.0
    %378 = vmatprep.subr.mxu0 0.0
    %379 = vmatpush1.msra.mxu0 0.0
    %380 = vmatprep.subr.mxu0 0.0
    %381 = vmatpush1.msra.mxu0 0.0
    %382 = vmatprep.subr.mxu0 0.0
    %383 = vmatpush1.msra.mxu0 0.0
    %384 = vmatprep.subr.mxu0 0.0
    %385 = vmatpush1.msra.mxu0 0.0
    %386 = vmatprep.subr.mxu0 0.0
    %387 = vmatpush1.msra.mxu0 0.0
    %388 = vmatprep.mubr.f32.mxu0 0.0
    %389 = vmatmul.mubr.f32.gmra.mrb[0].mxu0 %v319
    %v390 = vpop.f32.mrb[0].mxu0
    %v391 = vadd.f32 0.0, %v390
    %v392 = vpop.f32.mrb[0].mxu0
    %393 = vmatprep.mubr.f32.mxu0 0.0
    %394 = vmatmul.mubr.f32.gmra.mrb[0].mxu0 %v322
    %v395 = vpop.f32.mrb[0].mxu0
    %v396 = vadd.f32 0.0, %v395
    %v397 = vpop.f32.mrb[0].mxu0
    %398 = vdwg.mxu0
    %v400 = vsel %vm317, %v122, 0
    %v403 = vsel %vm317, %v123, 0
    %405 = vmatprep.subr.mxu0 0.0
    %406 = vmatpush1.msra.mxu0 %v315
    %407 = vmatprep.subr.mxu0 0.0
    %408 = vmatpush1.msra.mxu0 %v316
    %409 = vmatprep.subr.mxu0 0.0
    %410 = vmatpush1.msra.mxu0 0.0
    %411 = vmatprep.subr.mxu0 0.0
    %412 = vmatpush1.msra.mxu0 0.0
    %413 = vmatprep.subr.mxu0 0.0
    %414 = vmatpush1.msra.mxu0 0.0
    %415 = vmatprep.subr.mxu0 0.0
    %416 = vmatpush1.msra.mxu0 0.0
    %417 = vmatprep.subr.mxu0 0.0
    %418 = vmatpush1.msra.mxu0 0.0
    %419 = vmatprep.subr.mxu0 0.0
    %420 = vmatpush1.msra.mxu0 0.0
    %421 = vmatprep.subr.mxu0 0.0
    %422 = vmatpush1.msra.mxu0 0.0
    %423 = vmatprep.subr.mxu0 0.0
    %424 = vmatpush1.msra.mxu0 0.0
    %425 = vmatprep.subr.mxu0 0.0
    %426 = vmatpush1.msra.mxu0 0.0
    %427 = vmatprep.subr.mxu0 0.0
    %428 = vmatpush1.msra.mxu0 0.0
    %429 = vmatprep.subr.mxu0 0.0
    %430 = vmatpush1.msra.mxu0 0.0
    %431 = vmatprep.subr.mxu0 0.0
    %432 = vmatpush1.msra.mxu0 0.0
    %433 = vmatprep.subr.mxu0 0.0
    %434 = vmatpush1.msra.mxu0 0.0
    %435 = vmatprep.subr.mxu0 0.0
    %436 = vmatpush1.msra.mxu0 0.0
    %437 = vmatprep.subr.mxu0 0.0
    %438 = vmatpush1.msra.mxu0 0.0
    %439 = vmatprep.subr.mxu0 0.0
    %440 = vmatpush1.msra.mxu0 0.0
    %441 = vmatprep.subr.mxu0 0.0
    %442 = vmatpush1.msra.mxu0 0.0
    %443 = vmatprep.subr.mxu0 0.0
    %444 = vmatpush1.msra.mxu0 0.0
    %445 = vmatprep.subr.mxu0 0.0
    %446 = vmatpush1.msra.mxu0 0.0
    %447 = vmatprep.subr.mxu0 0.0
    %448 = vmatpush1.msra.mxu0 0.0
    %449 = vmatprep.subr.mxu0 0.0
    %450 = vmatpush1.msra.mxu0 0.0
    %451 = vmatprep.subr.mxu0 0.0
    %452 = vmatpush1.msra.mxu0 0.0
    %453 = vmatprep.subr.mxu0 0.0
    %454 = vmatpush1.msra.mxu0 0.0
    %455 = vmatprep.subr.mxu0 0.0
    %456 = vmatpush1.msra.mxu0 0.0
    %457 = vmatprep.subr.mxu0 0.0
    %458 = vmatpush1.msra.mxu0 0.0
    %459 = vmatprep.subr.mxu0 0.0
    %460 = vmatpush1.msra.mxu0 0.0
    %461 = vmatprep.subr.mxu0 0.0
    %462 = vmatpush1.msra.mxu0 0.0
    %463 = vmatprep.subr.mxu0 0.0
    %464 = vmatpush1.msra.mxu0 0.0
    %465 = vmatprep.subr.mxu0 0.0
    %466 = vmatpush1.msra.mxu0 0.0
    %467 = vmatprep.subr.mxu0 0.0
    %468 = vmatpush1.msra.mxu0 0.0
    %469 = vmatprep.mubr.f32.mxu0 0.0
    %470 = vmatmul.mubr.f32.gmra.mrb[0].mxu0 %v400
    %v471 = vpop.f32.mrb[0].mxu0
    %v472 = vadd.f32 0.0, %v471
    %v473 = vpop.f32.mrb[0].mxu0
    %474 = vmatprep.mubr.f32.mxu0 0.0
    %475 = vmatmul.mubr.f32.gmra.mrb[0].mxu0 %v403
    %v476 = vpop.f32.mrb[0].mxu0
    %v477 = vadd.f32 0.0, %v476
    %v478 = vpop.f32.mrb[0].mxu0
    %479 = vdwg.mxu0
    %v480 = vld [vmem:[#allocation7] sm:$0xff]
    %v481 = vld [vmem:[#allocation7 + $0x8] sm:$0xff]
    %v482 = vld [vmem:[#allocation7 + $0x10] sm:$0xff]
    %v483 = vld [vmem:[#allocation7 + $0x18] sm:$0xff]
    %v484 = vld [vmem:[#allocation7 + $0x20] sm:$0xff]
    %v485 = vld [vmem:[#allocation7 + $0x28] sm:$0xff]
    %v486 = vld [vmem:[#allocation7 + $0x30] sm:$0xff]
    %v487 = vld [vmem:[#allocation7 + $0x38] sm:$0xff]
    %v488 = vld [vmem:[#allocation7 + $0x40] sm:$0xff]
    %v489 = vld [vmem:[#allocation7 + $0x48] sm:$0xff]
    %v490 = vld [vmem:[#allocation7 + $0x50] sm:$0xff]
    %v491 = vld [vmem:[#allocation7 + $0x58] sm:$0xff]
    %v492 = vld [vmem:[#allocation7 + $0x60] sm:$0xff]
    %v493 = vld [vmem:[#allocation7 + $0x68] sm:$0xff]
    %v494 = vld [vmem:[#allocation7 + $0x70] sm:$0xff]
    %v495 = vld [vmem:[#allocation7 + $0x78] sm:$0xff]
    %s496 = scalar_lea.vmem [#allocation7], 128
    %v497 = vld [vmem:[%s496] sm:$0xff]
    %v498 = vld [vmem:[%s496 + $0x8] sm:$0xff]
    %v499 = vld [vmem:[%s496 + $0x10] sm:$0xff]
    %v500 = vld [vmem:[%s496 + $0x18] sm:$0xff]
    %v501 = vld [vmem:[%s496 + $0x20] sm:$0xff]
    %v502 = vld [vmem:[%s496 + $0x28] sm:$0xff]
    %v503 = vld [vmem:[%s496 + $0x30] sm:$0xff]
    %v504 = vld [vmem:[%s496 + $0x38] sm:$0xff]
    %v505 = vld [vmem:[%s496 + $0x40] sm:$0xff]
    %v506 = vld [vmem:[%s496 + $0x48] sm:$0xff]
    %v507 = vld [vmem:[%s496 + $0x50] sm:$0xff]
    %v508 = vld [vmem:[%s496 + $0x58] sm:$0xff]
    %v509 = vld [vmem:[%s496 + $0x60] sm:$0xff]
    %v510 = vld [vmem:[%s496 + $0x68] sm:$0xff]
    %v511 = vld [vmem:[%s496 + $0x70] sm:$0xff]
    %v512 = vld [vmem:[%s496 + $0x78] sm:$0xff]
    %513 = vmatprep.subr.mxu0 0.0
    %514 = vmatpush1.msra.mxu0 %v497
    %515 = vmatprep.subr.mxu0 0.0
    %516 = vmatpush1.msra.mxu0 %v498
    %517 = vmatprep.subr.mxu0 0.0
    %518 = vmatpush1.msra.mxu0 %v499
    %519 = vmatprep.subr.mxu0 0.0
    %520 = vmatpush1.msra.mxu0 %v500
    %521 = vmatprep.subr.mxu0 0.0
    %522 = vmatpush1.msra.mxu0 %v501
    %523 = vmatprep.subr.mxu0 0.0
    %524 = vmatpush1.msra.mxu0 %v502
    %525 = vmatprep.subr.mxu0 0.0
    %526 = vmatpush1.msra.mxu0 %v503
    %527 = vmatprep.subr.mxu0 0.0
    %528 = vmatpush1.msra.mxu0 %v504
    %529 = vmatprep.subr.mxu0 0.0
    %530 = vmatpush1.msra.mxu0 %v505
    %531 = vmatprep.subr.mxu0 0.0
    %532 = vmatpush1.msra.mxu0 %v506
    %533 = vmatprep.subr.mxu0 0.0
    %534 = vmatpush1.msra.mxu0 %v507
    %535 = vmatprep.subr.mxu0 0.0
    %536 = vmatpush1.msra.mxu0 %v508
    %537 = vmatprep.subr.mxu0 0.0
    %538 = vmatpush1.msra.mxu0 %v509
    %539 = vmatprep.subr.mxu0 0.0
    %540 = vmatpush1.msra.mxu0 %v510
    %541 = vmatprep.subr.mxu0 0.0
    %542 = vmatpush1.msra.mxu0 %v511
    %543 = vmatprep.subr.mxu0 0.0
    %544 = vmatpush1.msra.mxu0 %v512
    %545 = vmatprep.subr.mxu0 0.0
    %546 = vmatpush1.msra.mxu0 0.0
    %547 = vmatprep.subr.mxu0 0.0
    %548 = vmatpush1.msra.mxu0 0.0
    %549 = vmatprep.subr.mxu0 0.0
    %550 = vmatpush1.msra.mxu0 0.0
    %551 = vmatprep.subr.mxu0 0.0
    %552 = vmatpush1.msra.mxu0 0.0
    %553 = vmatprep.subr.mxu0 0.0
    %554 = vmatpush1.msra.mxu0 0.0
    %555 = vmatprep.subr.mxu0 0.0
    %556 = vmatpush1.msra.mxu0 0.0
    %557 = vmatprep.subr.mxu0 0.0
    %558 = vmatpush1.msra.mxu0 0.0
    %559 = vmatprep.subr.mxu0 0.0
    %560 = vmatpush1.msra.mxu0 0.0
    %561 = vmatprep.subr.mxu0 0.0
    %562 = vmatpush1.msra.mxu0 0.0
    %563 = vmatprep.subr.mxu0 0.0
    %564 = vmatpush1.msra.mxu0 0.0
    %565 = vmatprep.subr.mxu0 0.0
    %566 = vmatpush1.msra.mxu0 0.0
    %567 = vmatprep.subr.mxu0 0.0
    %568 = vmatpush1.msra.mxu0 0.0
    %569 = vmatprep.subr.mxu0 0.0
    %570 = vmatpush1.msra.mxu0 0.0
    %571 = vmatprep.subr.mxu0 0.0
    %572 = vmatpush1.msra.mxu0 0.0
    %573 = vmatprep.subr.mxu0 0.0
    %574 = vmatpush1.msra.mxu0 0.0
    %575 = vmatprep.subr.mxu0 0.0
    %576 = vmatpush1.msra.mxu0 0.0
    %577 = vmatprep.mubr.f32.mxu0 0.0
    %578 = vmatmul.mubr.f32.gmra.mrb[0].mxu0 %v315
    %v579 = vpop.f32.mrb[0].mxu0
    %v580 = vadd.f32 0.0, %v579
    %v581 = vpop.f32.mrb[0].mxu0
    %582 = vmatprep.mubr.f32.mxu0 0.0
    %583 = vmatmul.mubr.f32.gmra.mrb[0].mxu0 %v316
    %v584 = vpop.f32.mrb[0].mxu0
    %v585 = vadd.f32 0.0, %v584
    %v586 = vpop.f32.mrb[0].mxu0
    %587 = vdwg.mxu0
    %588 = vmatprep.subr.mxu0 0.0
    %589 = vmatpush1.msra.mxu0 %v480
    %590 = vmatprep.subr.mxu0 0.0
    %591 = vmatpush1.msra.mxu0 %v481
    %592 = vmatprep.subr.mxu0 0.0
    %593 = vmatpush1.msra.mxu0 %v482
    %594 = vmatprep.subr.mxu0 0.0
    %595 = vmatpush1.msra.mxu0 %v483
    %596 = vmatprep.subr.mxu0 0.0
    %597 = vmatpush1.msra.mxu0 %v484
    %598 = vmatprep.subr.mxu0 0.0
    %599 = vmatpush1.msra.mxu0 %v485
    %600 = vmatprep.subr.mxu0 0.0
    %601 = vmatpush1.msra.mxu0 %v486
    %602 = vmatprep.subr.mxu0 0.0
    %603 = vmatpush1.msra.mxu0 %v487
    %604 = vmatprep.subr.mxu0 0.0
    %605 = vmatpush1.msra.mxu0 %v488
    %606 = vmatprep.subr.mxu0 0.0
    %607 = vmatpush1.msra.mxu0 %v489
    %608 = vmatprep.subr.mxu0 0.0
    %609 = vmatpush1.msra.mxu0 %v490
    %610 = vmatprep.subr.mxu0 0.0
    %611 = vmatpush1.msra.mxu0 %v491
    %612 = vmatprep.subr.mxu0 0.0
    %613 = vmatpush1.msra.mxu0 %v492
    %614 = vmatprep.subr.mxu0 0.0
    %615 = vmatpush1.msra.mxu0 %v493
    %616 = vmatprep.subr.mxu0 0.0
    %617 = vmatpush1.msra.mxu0 %v494
    %618 = vmatprep.subr.mxu0 0.0
    %619 = vmatpush1.msra.mxu0 %v495
    %620 = vmatprep.subr.mxu0 0.0
    %621 = vmatpush1.msra.mxu0 0.0
    %622 = vmatprep.subr.mxu0 0.0
    %623 = vmatpush1.msra.mxu0 0.0
    %624 = vmatprep.subr.mxu0 0.0
    %625 = vmatpush1.msra.mxu0 0.0
    %626 = vmatprep.subr.mxu0 0.0
    %627 = vmatpush1.msra.mxu0 0.0
    %628 = vmatprep.subr.mxu0 0.0
    %629 = vmatpush1.msra.mxu0 0.0
    %630 = vmatprep.subr.mxu0 0.0
    %631 = vmatpush1.msra.mxu0 0.0
    %632 = vmatprep.subr.mxu0 0.0
    %633 = vmatpush1.msra.mxu0 0.0
    %634 = vmatprep.subr.mxu0 0.0
    %635 = vmatpush1.msra.mxu0 0.0
    %636 = vmatprep.subr.mxu0 0.0
    %637 = vmatpush1.msra.mxu0 0.0
    %638 = vmatprep.subr.mxu0 0.0
    %639 = vmatpush1.msra.mxu0 0.0
    %640 = vmatprep.subr.mxu0 0.0
    %641 = vmatpush1.msra.mxu0 0.0
    %642 = vmatprep.subr.mxu0 0.0
    %643 = vmatpush1.msra.mxu0 0.0
    %644 = vmatprep.subr.mxu0 0.0
    %645 = vmatpush1.msra.mxu0 0.0
    %646 = vmatprep.subr.mxu0 0.0
    %647 = vmatpush1.msra.mxu0 0.0
    %648 = vmatprep.subr.mxu0 0.0
    %649 = vmatpush1.msra.mxu0 0.0
    %650 = vmatprep.subr.mxu0 0.0
    %651 = vmatpush1.msra.mxu0 0.0
    %652 = vmatprep.mubr.f32.mxu0 0.0
    %653 = vmatmul.mubr.f32.gmra.mrb[0].mxu0 %v391
    %v654 = vpop.f32.mrb[0].mxu0
    %v655 = vadd.f32 %v580, %v654
    %v656 = vpop.f32.mrb[0].mxu0
    %657 = vmatprep.mubr.f32.mxu0 0.0
    %658 = vmatmul.mubr.f32.gmra.mrb[0].mxu0 %v396
    %v659 = vpop.f32.mrb[0].mxu0
    %v660 = vadd.f32 %v585, %v659
    %v661 = vpop.f32.mrb[0].mxu0
    %662 = vdwg.mxu0
    %s663 = scalar_lea.vmem [#allocation7], 256
    %v664 = vld [vmem:[%s663] sm:$0xff]
    %v665 = vld [vmem:[%s663 + $0x8] sm:$0xff]
    %v666 = vld [vmem:[%s663 + $0x10] sm:$0xff]
    %v667 = vld [vmem:[%s663 + $0x18] sm:$0xff]
    %v668 = vld [vmem:[%s663 + $0x20] sm:$0xff]
    %v669 = vld [vmem:[%s663 + $0x28] sm:$0xff]
    %v670 = vld [vmem:[%s663 + $0x30] sm:$0xff]
    %v671 = vld [vmem:[%s663 + $0x38] sm:$0xff]
    %v672 = vld [vmem:[%s663 + $0x40] sm:$0xff]
    %v673 = vld [vmem:[%s663 + $0x48] sm:$0xff]
    %v674 = vld [vmem:[%s663 + $0x50] sm:$0xff]
    %v675 = vld [vmem:[%s663 + $0x58] sm:$0xff]
    %v676 = vld [vmem:[%s663 + $0x60] sm:$0xff]
    %v677 = vld [vmem:[%s663 + $0x68] sm:$0xff]
    %v678 = vld [vmem:[%s663 + $0x70] sm:$0xff]
    %v679 = vld [vmem:[%s663 + $0x78] sm:$0xff]
    %680 = vmatprep.subr.mxu0 0.0
    %681 = vmatpush1.msra.mxu0 %v664
    %682 = vmatprep.subr.mxu0 0.0
    %683 = vmatpush1.msra.mxu0 %v665
    %684 = vmatprep.subr.mxu0 0.0
    %685 = vmatpush1.msra.mxu0 %v666
    %686 = vmatprep.subr.mxu0 0.0
    %687 = vmatpush1.msra.mxu0 %v667
    %688 = vmatprep.subr.mxu0 0.0
    %689 = vmatpush1.msra.mxu0 %v668
    %690 = vmatprep.subr.mxu0 0.0
    %691 = vmatpush1.msra.mxu0 %v669
    %692 = vmatprep.subr.mxu0 0.0
    %693 = vmatpush1.msra.mxu0 %v670
    %694 = vmatprep.subr.mxu0 0.0
    %695 = vmatpush1.msra.mxu0 %v671
    %696 = vmatprep.subr.mxu0 0.0
    %697 = vmatpush1.msra.mxu0 %v672
    %698 = vmatprep.subr.mxu0 0.0
    %699 = vmatpush1.msra.mxu0 %v673
    %700 = vmatprep.subr.mxu0 0.0
    %701 = vmatpush1.msra.mxu0 %v674
    %702 = vmatprep.subr.mxu0 0.0
    %703 = vmatpush1.msra.mxu0 %v675
    %704 = vmatprep.subr.mxu0 0.0
    %705 = vmatpush1.msra.mxu0 %v676
    %706 = vmatprep.subr.mxu0 0.0
    %707 = vmatpush1.msra.mxu0 %v677
    %708 = vmatprep.subr.mxu0 0.0
    %709 = vmatpush1.msra.mxu0 %v678
    %710 = vmatprep.subr.mxu0 0.0
    %711 = vmatpush1.msra.mxu0 %v679
    %712 = vmatprep.subr.mxu0 0.0
    %713 = vmatpush1.msra.mxu0 0.0
    %714 = vmatprep.subr.mxu0 0.0
    %715 = vmatpush1.msra.mxu0 0.0
    %716 = vmatprep.subr.mxu0 0.0
    %717 = vmatpush1.msra.mxu0 0.0
    %718 = vmatprep.subr.mxu0 0.0
    %719 = vmatpush1.msra.mxu0 0.0
    %720 = vmatprep.subr.mxu0 0.0
    %721 = vmatpush1.msra.mxu0 0.0
    %722 = vmatprep.subr.mxu0 0.0
    %723 = vmatpush1.msra.mxu0 0.0
    %724 = vmatprep.subr.mxu0 0.0
    %725 = vmatpush1.msra.mxu0 0.0
    %726 = vmatprep.subr.mxu0 0.0
    %727 = vmatpush1.msra.mxu0 0.0
    %728 = vmatprep.subr.mxu0 0.0
    %729 = vmatpush1.msra.mxu0 0.0
    %730 = vmatprep.subr.mxu0 0.0
    %731 = vmatpush1.msra.mxu0 0.0
    %732 = vmatprep.subr.mxu0 0.0
    %733 = vmatpush1.msra.mxu0 0.0
    %734 = vmatprep.subr.mxu0 0.0
    %735 = vmatpush1.msra.mxu0 0.0
    %736 = vmatprep.subr.mxu0 0.0
    %737 = vmatpush1.msra.mxu0 0.0
    %738 = vmatprep.subr.mxu0 0.0
    %739 = vmatpush1.msra.mxu0 0.0
    %740 = vmatprep.subr.mxu0 0.0
    %741 = vmatpush1.msra.mxu0 0.0
    %742 = vmatprep.subr.mxu0 0.0
    %743 = vmatpush1.msra.mxu0 0.0
    %744 = vmatprep.mubr.f32.mxu0 0.0
    %745 = vmatmul.mubr.f32.gmra.mrb[0].mxu0 %v472
    %v746 = vpop.f32.mrb[0].mxu0
    %v747 = vadd.f32 0.0, %v746
    %v748 = vpop.f32.mrb[0].mxu0
    %749 = vmatprep.mubr.f32.mxu0 0.0
    %750 = vmatmul.mubr.f32.gmra.mrb[0].mxu0 %v477
    %v751 = vpop.f32.mrb[0].mxu0
    %v752 = vadd.f32 0.0, %v751
    %v753 = vpop.f32.mrb[0].mxu0
    %754 = vdwg.mxu0
    %v755 = vadd.f32 %v655, %v747
    %v756 = vadd.f32 %v660, %v752
    %v757 = vld [vmem:[%s5] sm:$0x1]
    %v758 = vld [vmem:[%s6] sm:$0x1]
    %759 = vmatprep.subr.mxu0 0.0
    %760 = vmatpush1.msra.mxu0 %v87
    %761 = vmatprep.subr.mxu0 0.0
    %762 = vmatpush1.msra.mxu0 %v88
    %763 = vmatprep.subr.mxu0 0.0
    %764 = vmatpush1.msra.mxu0 %v89
    %765 = vmatprep.subr.mxu0 0.0
    %766 = vmatpush1.msra.mxu0 %v90
    %767 = vmatprep.subr.mxu0 0.0
    %768 = vmatpush1.msra.mxu0 %v91
    %769 = vmatprep.subr.mxu0 0.0
    %770 = vmatpush1.msra.mxu0 %v92
    %771 = vmatprep.subr.mxu0 0.0
    %772 = vmatpush1.msra.mxu0 %v93
    %773 = vmatprep.subr.mxu0 0.0
    %774 = vmatpush1.msra.mxu0 %v94
    %775 = vmatprep.subr.mxu0 0.0
    %776 = vmatpush1.msra.mxu0 %v95
    %777 = vmatprep.subr.mxu0 0.0
    %778 = vmatpush1.msra.mxu0 %v96
    %779 = vmatprep.subr.mxu0 0.0
    %780 = vmatpush1.msra.mxu0 %v97
    %781 = vmatprep.subr.mxu0 0.0
    %782 = vmatpush1.msra.mxu0 %v98
    %783 = vmatprep.subr.mxu0 0.0
    %784 = vmatpush1.msra.mxu0 %v99
    %785 = vmatprep.subr.mxu0 0.0
    %786 = vmatpush1.msra.mxu0 %v100
    %787 = vmatprep.subr.mxu0 0.0
    %788 = vmatpush1.msra.mxu0 %v101
    %789 = vmatprep.subr.mxu0 0.0
    %790 = vmatpush1.msra.mxu0 %v102
    %791 = vmatprep.subr.mxu0 0.0
    %792 = vmatpush1.msra.mxu0 0.0
    %793 = vmatprep.subr.mxu0 0.0
    %794 = vmatpush1.msra.mxu0 0.0
    %795 = vmatprep.subr.mxu0 0.0
    %796 = vmatpush1.msra.mxu0 0.0
    %797 = vmatprep.subr.mxu0 0.0
    %798 = vmatpush1.msra.mxu0 0.0
    %799 = vmatprep.subr.mxu0 0.0
    %800 = vmatpush1.msra.mxu0 0.0
    %801 = vmatprep.subr.mxu0 0.0
    %802 = vmatpush1.msra.mxu0 0.0
    %803 = vmatprep.subr.mxu0 0.0
    %804 = vmatpush1.msra.mxu0 0.0
    %805 = vmatprep.subr.mxu0 0.0
    %806 = vmatpush1.msra.mxu0 0.0
    %807 = vmatprep.subr.mxu0 0.0
    %808 = vmatpush1.msra.mxu0 0.0
    %809 = vmatprep.subr.mxu0 0.0
    %810 = vmatpush1.msra.mxu0 0.0
    %811 = vmatprep.subr.mxu0 0.0
    %812 = vmatpush1.msra.mxu0 0.0
    %813 = vmatprep.subr.mxu0 0.0
    %814 = vmatpush1.msra.mxu0 0.0
    %815 = vmatprep.subr.mxu0 0.0
    %816 = vmatpush1.msra.mxu0 0.0
    %817 = vmatprep.subr.mxu0 0.0
    %818 = vmatpush1.msra.mxu0 0.0
    %819 = vmatprep.subr.mxu0 0.0
    %820 = vmatpush1.msra.mxu0 0.0
    %821 = vmatprep.subr.mxu0 0.0
    %822 = vmatpush1.msra.mxu0 0.0
    %823 = vmatprep.mubr.f32.mxu0 0.0
    %824 = vmatmul.mubr.f32.gmra.mrb[0].mxu0 %v755
    %v825 = vpop.f32.mrb[0].mxu0
    %v826 = vadd.f32 0.0, %v825
    %v827 = vpop.f32.mrb[0].mxu0
    %828 = vmatprep.mubr.f32.mxu0 0.0
    %829 = vmatmul.mubr.f32.gmra.mrb[0].mxu0 %v756
    %v830 = vpop.f32.mrb[0].mxu0
    %v831 = vadd.f32 0.0, %v830
    %v832 = vpop.f32.mrb[0].mxu0
    %833 = vdwg.mxu0
    %v834 = vadd.f32 %v826, %v831
    %v835 = vrot.slane %v834, 4
    %v836 = vadd.f32 %v834, %v835
    %v837 = vrot.slane %v836, 2
    %v838 = vadd.f32 %v836, %v837
    %v839 = vrot.slane %v838, 1
    %v840 = vadd.f32 %v838, %v839
    %v841 = vmul.f32 %v840, 0.001953125
    %v842 = vsub.f32 %v755, %v841
    %v843 = vsub.f32 %v756, %v841
    %v844 = vmul.f32 %v842, %v842
    %v845 = vmul.f32 %v843, %v843
    %846 = vmatprep.subr.mxu0 0.0
    %847 = vmatpush1.msra.mxu0 %v87
    %848 = vmatprep.subr.mxu0 0.0
    %849 = vmatpush1.msra.mxu0 %v88
    %850 = vmatprep.subr.mxu0 0.0
    %851 = vmatpush1.msra.mxu0 %v89
    %852 = vmatprep.subr.mxu0 0.0
    %853 = vmatpush1.msra.mxu0 %v90
    %854 = vmatprep.subr.mxu0 0.0
    %855 = vmatpush1.msra.mxu0 %v91
    %856 = vmatprep.subr.mxu0 0.0
    %857 = vmatpush1.msra.mxu0 %v92
    %858 = vmatprep.subr.mxu0 0.0
    %859 = vmatpush1.msra.mxu0 %v93
    %860 = vmatprep.subr.mxu0 0.0
    %861 = vmatpush1.msra.mxu0 %v94
    %862 = vmatprep.subr.mxu0 0.0
    %863 = vmatpush1.msra.mxu0 %v95
    %864 = vmatprep.subr.mxu0 0.0
    %865 = vmatpush1.msra.mxu0 %v96
    %866 = vmatprep.subr.mxu0 0.0
    %867 = vmatpush1.msra.mxu0 %v97
    %868 = vmatprep.subr.mxu0 0.0
    %869 = vmatpush1.msra.mxu0 %v98
    %870 = vmatprep.subr.mxu0 0.0
    %871 = vmatpush1.msra.mxu0 %v99
    %872 = vmatprep.subr.mxu0 0.0
    %873 = vmatpush1.msra.mxu0 %v100
    %874 = vmatprep.subr.mxu0 0.0
    %875 = vmatpush1.msra.mxu0 %v101
    %876 = vmatprep.subr.mxu0 0.0
    %877 = vmatpush1.msra.mxu0 %v102
    %878 = vmatprep.subr.mxu0 0.0
    %879 = vmatpush1.msra.mxu0 0.0
    %880 = vmatprep.subr.mxu0 0.0
    %881 = vmatpush1.msra.mxu0 0.0
    %882 = vmatprep.subr.mxu0 0.0
    %883 = vmatpush1.msra.mxu0 0.0
    %884 = vmatprep.subr.mxu0 0.0
    %885 = vmatpush1.msra.mxu0 0.0
    %886 = vmatprep.subr.mxu0 0.0
    %887 = vmatpush1.msra.mxu0 0.0
    %888 = vmatprep.subr.mxu0 0.0
    %889 = vmatpush1.msra.mxu0 0.0
    %890 = vmatprep.subr.mxu0 0.0
    %891 = vmatpush1.msra.mxu0 0.0
    %892 = vmatprep.subr.mxu0 0.0
    %893 = vmatpush1.msra.mxu0 0.0
    %894 = vmatprep.subr.mxu0 0.0
    %895 = vmatpush1.msra.mxu0 0.0
    %896 = vmatprep.subr.mxu0 0.0
    %897 = vmatpush1.msra.mxu0 0.0
    %898 = vmatprep.subr.mxu0 0.0
    %899 = vmatpush1.msra.mxu0 0.0
    %900 = vmatprep.subr.mxu0 0.0
    %901 = vmatpush1.msra.mxu0 0.0
    %902 = vmatprep.subr.mxu0 0.0
    %903 = vmatpush1.msra.mxu0 0.0
    %904 = vmatprep.subr.mxu0 0.0
    %905 = vmatpush1.msra.mxu0 0.0
    %906 = vmatprep.subr.mxu0 0.0
    %907 = vmatpush1.msra.mxu0 0.0
    %908 = vmatprep.subr.mxu0 0.0
    %909 = vmatpush1.msra.mxu0 0.0
    %910 = vmatprep.mubr.f32.mxu0 0.0
    %911 = vmatmul.mubr.f32.gmra.mrb[0].mxu0 %v844
    %v912 = vpop.f32.mrb[0].mxu0
    %v913 = vadd.f32 0.0, %v912
    %v914 = vpop.f32.mrb[0].mxu0
    %915 = vmatprep.mubr.f32.mxu0 0.0
    %916 = vmatmul.mubr.f32.gmra.mrb[0].mxu0 %v845
    %v917 = vpop.f32.mrb[0].mxu0
    %v918 = vadd.f32 0.0, %v917
    %v919 = vpop.f32.mrb[0].mxu0
    %920 = vdwg.mxu0
    %v921 = vadd.f32 %v913, %v918
    %v922 = vrot.slane %v921, 4
    %v923 = vadd.f32 %v921, %v922
    %v924 = vrot.slane %v923, 2
    %v925 = vadd.f32 %v923, %v924
    %v926 = vrot.slane %v925, 1
    %v927 = vadd.f32 %v925, %v926
    %v928 = vmul.f32 %v927, 0.001953125
    %v929 = vadd.f32 %v928, 1e-05
    %v930 = vrsqrt.pop %v929
    %v931 = vmul.f32 %v757, %v930
    %v933 = vlaneseq
    %v934 = vshrl.u32 %v933, 7
    %v935 = vsub.s32 0, %v934
    %v936 = vrot.slane %v931, %v935
    %v938 = vmul.f32 %v842, %v936
    %v939 = vmul.f32 %v843, %v936
    %v941 = vlaneseq
    %v942 = vshrl.u32 %v941, 7
    %v943 = vsub.s32 0, %v942
    %v944 = vrot.slane %v758, %v943
    %v946 = vadd.f32 %v938, %v944
    %v947 = vadd.f32 %v939, %v944
    %v948 = vmax.f32 %v946, 0.0
    %v949 = vmax.f32 %v947, 0.0
    %950 = vmatprep.subr.mxu0 0.0
    %951 = vmatpush1.msra.mxu0 %v948
    %952 = vmatprep.subr.mxu0 0.0
    %953 = vmatpush1.msra.mxu0 %v949
    %954 = vmatprep.subr.mxu0 0.0
    %955 = vmatpush1.msra.mxu0 0.0
    %956 = vmatprep.subr.mxu0 0.0
    %957 = vmatpush1.msra.mxu0 0.0
    %958 = vmatprep.subr.mxu0 0.0
    %959 = vmatpush1.msra.mxu0 0.0
    %960 = vmatprep.subr.mxu0 0.0
    %961 = vmatpush1.msra.mxu0 0.0
    %962 = vmatprep.subr.mxu0 0.0
    %963 = vmatpush1.msra.mxu0 0.0
    %964 = vmatprep.subr.mxu0 0.0
    %965 = vmatpush1.msra.mxu0 0.0
    %966 = vmatprep.subr.mxu0 0.0
    %967 = vmatpush1.msra.mxu0 0.0
    %968 = vmatprep.subr.mxu0 0.0
    %969 = vmatpush1.msra.mxu0 0.0
    %970 = vmatprep.subr.mxu0 0.0
    %971 = vmatpush1.msra.mxu0 0.0
    %972 = vmatprep.subr.mxu0 0.0
    %973 = vmatpush1.msra.mxu0 0.0
    %974 = vmatprep.subr.mxu0 0.0
    %975 = vmatpush1.msra.mxu0 0.0
    %976 = vmatprep.subr.mxu0 0.0
    %977 = vmatpush1.msra.mxu0 0.0
    %978 = vmatprep.subr.mxu0 0.0
    %979 = vmatpush1.msra.mxu0 0.0
    %980 = vmatprep.subr.mxu0 0.0
    %981 = vmatpush1.msra.mxu0 0.0
    %982 = vmatprep.subr.mxu0 0.0
    %983 = vmatpush1.msra.mxu0 0.0
    %984 = vmatprep.subr.mxu0 0.0
    %985 = vmatpush1.msra.mxu0 0.0
    %986 = vmatprep.subr.mxu0 0.0
    %987 = vmatpush1.msra.mxu0 0.0
    %988 = vmatprep.subr.mxu0 0.0
    %989 = vmatpush1.msra.mxu0 0.0
    %990 = vmatprep.subr.mxu0 0.0
    %991 = vmatpush1.msra.mxu0 0.0
    %992 = vmatprep.subr.mxu0 0.0
    %993 = vmatpush1.msra.mxu0 0.0
    %994 = vmatprep.subr.mxu0 0.0
    %995 = vmatpush1.msra.mxu0 0.0
    %996 = vmatprep.subr.mxu0 0.0
    %997 = vmatpush1.msra.mxu0 0.0
    %998 = vmatprep.subr.mxu0 0.0
    %999 = vmatpush1.msra.mxu0 0.0
    %1000 = vmatprep.subr.mxu0 0.0
    %1001 = vmatpush1.msra.mxu0 0.0
    %1002 = vmatprep.subr.mxu0 0.0
    %1003 = vmatpush1.msra.mxu0 0.0
    %1004 = vmatprep.subr.mxu0 0.0
    %1005 = vmatpush1.msra.mxu0 0.0
    %1006 = vmatprep.subr.mxu0 0.0
    %1007 = vmatpush1.msra.mxu0 0.0
    %1008 = vmatprep.subr.mxu0 0.0
    %1009 = vmatpush1.msra.mxu0 0.0
    %1010 = vmatprep.subr.mxu0 0.0
    %1011 = vmatpush1.msra.mxu0 0.0
    %1012 = vmatprep.subr.mxu0 0.0
    %1013 = vmatpush1.msra.mxu0 0.0
    %1014 = vmatprep.mubr.f32.mxu0 0.0
    %1015 = vmatmul.mubr.f32.gmra.mrb[0].mxu0 %v319
    %v1016 = vpop.f32.mrb[0].mxu0
    %v1017 = vadd.f32 0.0, %v1016
    %v1018 = vpop.f32.mrb[0].mxu0
    %1019 = vmatprep.mubr.f32.mxu0 0.0
    %1020 = vmatmul.mubr.f32.gmra.mrb[0].mxu0 %v322
    %v1021 = vpop.f32.mrb[0].mxu0
    %v1022 = vadd.f32 0.0, %v1021
    %v1023 = vpop.f32.mrb[0].mxu0
    %1024 = vdwg.mxu0
    %1025 = vmatprep.subr.mxu0 0.0
    %1026 = vmatpush1.msra.mxu0 %v948
    %1027 = vmatprep.subr.mxu0 0.0
    %1028 = vmatpush1.msra.mxu0 %v949
    %1029 = vmatprep.subr.mxu0 0.0
    %1030 = vmatpush1.msra.mxu0 0.0
    %1031 = vmatprep.subr.mxu0 0.0
    %1032 = vmatpush1.msra.mxu0 0.0
    %1033 = vmatprep.subr.mxu0 0.0
    %1034 = vmatpush1.msra.mxu0 0.0
    %1035 = vmatprep.subr.mxu0 0.0
    %1036 = vmatpush1.msra.mxu0 0.0
    %1037 = vmatprep.subr.mxu0 0.0
    %1038 = vmatpush1.msra.mxu0 0.0
    %1039 = vmatprep.subr.mxu0 0.0
    %1040 = vmatpush1.msra.mxu0 0.0
    %1041 = vmatprep.subr.mxu0 0.0
    %1042 = vmatpush1.msra.mxu0 0.0
    %1043 = vmatprep.subr.mxu0 0.0
    %1044 = vmatpush1.msra.mxu0 0.0
    %1045 = vmatprep.subr.mxu0 0.0
    %1046 = vmatpush1.msra.mxu0 0.0
    %1047 = vmatprep.subr.mxu0 0.0
    %1048 = vmatpush1.msra.mxu0 0.0
    %1049 = vmatprep.subr.mxu0 0.0
    %1050 = vmatpush1.msra.mxu0 0.0
    %1051 = vmatprep.subr.mxu0 0.0
    %1052 = vmatpush1.msra.mxu0 0.0
    %1053 = vmatprep.subr.mxu0 0.0
    %1054 = vmatpush1.msra.mxu0 0.0
    %1055 = vmatprep.subr.mxu0 0.0
    %1056 = vmatpush1.msra.mxu0 0.0
    %1057 = vmatprep.subr.mxu0 0.0
    %1058 = vmatpush1.msra.mxu0 0.0
    %1059 = vmatprep.subr.mxu0 0.0
    %1060 = vmatpush1.msra.mxu0 0.0
    %1061 = vmatprep.subr.mxu0 0.0
    %1062 = vmatpush1.msra.mxu0 0.0
    %1063 = vmatprep.subr.mxu0 0.0
    %1064 = vmatpush1.msra.mxu0 0.0
    %1065 = vmatprep.subr.mxu0 0.0
    %1066 = vmatpush1.msra.mxu0 0.0
    %1067 = vmatprep.subr.mxu0 0.0
    %1068 = vmatpush1.msra.mxu0 0.0
    %1069 = vmatprep.subr.mxu0 0.0
    %1070 = vmatpush1.msra.mxu0 0.0
    %1071 = vmatprep.subr.mxu0 0.0
    %1072 = vmatpush1.msra.mxu0 0.0
    %1073 = vmatprep.subr.mxu0 0.0
    %1074 = vmatpush1.msra.mxu0 0.0
    %1075 = vmatprep.subr.mxu0 0.0
    %1076 = vmatpush1.msra.mxu0 0.0
    %1077 = vmatprep.subr.mxu0 0.0
    %1078 = vmatpush1.msra.mxu0 0.0
    %1079 = vmatprep.subr.mxu0 0.0
    %1080 = vmatpush1.msra.mxu0 0.0
    %1081 = vmatprep.subr.mxu0 0.0
    %1082 = vmatpush1.msra.mxu0 0.0
    %1083 = vmatprep.subr.mxu0 0.0
    %1084 = vmatpush1.msra.mxu0 0.0
    %1085 = vmatprep.subr.mxu0 0.0
    %1086 = vmatpush1.msra.mxu0 0.0
    %1087 = vmatprep.subr.mxu0 0.0
    %1088 = vmatpush1.msra.mxu0 0.0
    %1089 = vmatprep.mubr.f32.mxu0 0.0
    %1090 = vmatmul.mubr.f32.gmra.mrb[0].mxu0 %v400
    %v1091 = vpop.f32.mrb[0].mxu0
    %v1092 = vadd.f32 0.0, %v1091
    %v1093 = vpop.f32.mrb[0].mxu0
    %1094 = vmatprep.mubr.f32.mxu0 0.0
    %1095 = vmatmul.mubr.f32.gmra.mrb[0].mxu0 %v403
    %v1096 = vpop.f32.mrb[0].mxu0
    %v1097 = vadd.f32 0.0, %v1096
    %v1098 = vpop.f32.mrb[0].mxu0
    %1099 = vdwg.mxu0
    %v1100 = vld [vmem:[#allocation8] sm:$0xff]
    %v1101 = vld [vmem:[#allocation8 + $0x8] sm:$0xff]
    %v1102 = vld [vmem:[#allocation8 + $0x10] sm:$0xff]
    %v1103 = vld [vmem:[#allocation8 + $0x18] sm:$0xff]
    %v1104 = vld [vmem:[#allocation8 + $0x20] sm:$0xff]
    %v1105 = vld [vmem:[#allocation8 + $0x28] sm:$0xff]
    %v1106 = vld [vmem:[#allocation8 + $0x30] sm:$0xff]
    %v1107 = vld [vmem:[#allocation8 + $0x38] sm:$0xff]
    %v1108 = vld [vmem:[#allocation8 + $0x40] sm:$0xff]
    %v1109 = vld [vmem:[#allocation8 + $0x48] sm:$0xff]
    %v1110 = vld [vmem:[#allocation8 + $0x50] sm:$0xff]
    %v1111 = vld [vmem:[#allocation8 + $0x58] sm:$0xff]
    %v1112 = vld [vmem:[#allocation8 + $0x60] sm:$0xff]
    %v1113 = vld [vmem:[#allocation8 + $0x68] sm:$0xff]
    %v1114 = vld [vmem:[#allocation8 + $0x70] sm:$0xff]
    %v1115 = vld [vmem:[#allocation8 + $0x78] sm:$0xff]
    %1116 = vmatprep.subr.mxu0 0.0
    %1117 = vmatpush1.msra.mxu0 %v1100
    %1118 = vmatprep.subr.mxu0 0.0
    %1119 = vmatpush1.msra.mxu0 %v1101
    %1120 = vmatprep.subr.mxu0 0.0
    %1121 = vmatpush1.msra.mxu0 %v1102
    %1122 = vmatprep.subr.mxu0 0.0
    %1123 = vmatpush1.msra.mxu0 %v1103
    %1124 = vmatprep.subr.mxu0 0.0
    %1125 = vmatpush1.msra.mxu0 %v1104
    %1126 = vmatprep.subr.mxu0 0.0
    %1127 = vmatpush1.msra.mxu0 %v1105
    %1128 = vmatprep.subr.mxu0 0.0
    %1129 = vmatpush1.msra.mxu0 %v1106
    %1130 = vmatprep.subr.mxu0 0.0
    %1131 = vmatpush1.msra.mxu0 %v1107
    %1132 = vmatprep.subr.mxu0 0.0
    %1133 = vmatpush1.msra.mxu0 %v1108
    %1134 = vmatprep.subr.mxu0 0.0
    %1135 = vmatpush1.msra.mxu0 %v1109
    %1136 = vmatprep.subr.mxu0 0.0
    %1137 = vmatpush1.msra.mxu0 %v1110
    %1138 = vmatprep.subr.mxu0 0.0
    %1139 = vmatpush1.msra.mxu0 %v1111
    %1140 = vmatprep.subr.mxu0 0.0
    %1141 = vmatpush1.msra.mxu0 %v1112
    %1142 = vmatprep.subr.mxu0 0.0
    %1143 = vmatpush1.msra.mxu0 %v1113
    %1144 = vmatprep.subr.mxu0 0.0
    %1145 = vmatpush1.msra.mxu0 %v1114
    %1146 = vmatprep.subr.mxu0 0.0
    %1147 = vmatpush1.msra.mxu0 %v1115
    %1148 = vmatprep.subr.mxu0 0.0
    %1149 = vmatpush1.msra.mxu0 0.0
    %1150 = vmatprep.subr.mxu0 0.0
    %1151 = vmatpush1.msra.mxu0 0.0
    %1152 = vmatprep.subr.mxu0 0.0
    %1153 = vmatpush1.msra.mxu0 0.0
    %1154 = vmatprep.subr.mxu0 0.0
    %1155 = vmatpush1.msra.mxu0 0.0
    %1156 = vmatprep.subr.mxu0 0.0
    %1157 = vmatpush1.msra.mxu0 0.0
    %1158 = vmatprep.subr.mxu0 0.0
    %1159 = vmatpush1.msra.mxu0 0.0
    %1160 = vmatprep.subr.mxu0 0.0
    %1161 = vmatpush1.msra.mxu0 0.0
    %1162 = vmatprep.subr.mxu0 0.0
    %1163 = vmatpush1.msra.mxu0 0.0
    %1164 = vmatprep.subr.mxu0 0.0
    %1165 = vmatpush1.msra.mxu0 0.0
    %1166 = vmatprep.subr.mxu0 0.0
    %1167 = vmatpush1.msra.mxu0 0.0
    %1168 = vmatprep.subr.mxu0 0.0
    %1169 = vmatpush1.msra.mxu0 0.0
    %1170 = vmatprep.subr.mxu0 0.0
    %1171 = vmatpush1.msra.mxu0 0.0
    %1172 = vmatprep.subr.mxu0 0.0
    %1173 = vmatpush1.msra.mxu0 0.0
    %1174 = vmatprep.subr.mxu0 0.0
    %1175 = vmatpush1.msra.mxu0 0.0
    %1176 = vmatprep.subr.mxu0 0.0
    %1177 = vmatpush1.msra.mxu0 0.0
    %1178 = vmatprep.subr.mxu0 0.0
    %1179 = vmatpush1.msra.mxu0 0.0
    %1180 = vmatprep.mubr.f32.mxu0 0.0
    %1181 = vmatmul.mubr.f32.gmra.mrb[0].mxu0 %v1017
    %v1182 = vpop.f32.mrb[0].mxu0
    %v1183 = vadd.f32 0.0, %v1182
    %v1184 = vpop.f32.mrb[0].mxu0
    %1185 = vmatprep.mubr.f32.mxu0 0.0
    %1186 = vmatmul.mubr.f32.gmra.mrb[0].mxu0 %v1022
    %v1187 = vpop.f32.mrb[0].mxu0
    %v1188 = vadd.f32 0.0, %v1187
    %v1189 = vpop.f32.mrb[0].mxu0
    %1190 = vdwg.mxu0
    %v1191 = vadd.f32 %v85, %v1183
    %v1192 = vadd.f32 %v86, %v1188
    %s1193 = scalar_lea.vmem [#allocation8], 128
    %v1194 = vld [vmem:[%s1193] sm:$0xff]
    %v1195 = vld [vmem:[%s1193 + $0x8] sm:$0xff]
    %v1196 = vld [vmem:[%s1193 + $0x10] sm:$0xff]
    %v1197 = vld [vmem:[%s1193 + $0x18] sm:$0xff]
    %v1198 = vld [vmem:[%s1193 + $0x20] sm:$0xff]
    %v1199 = vld [vmem:[%s1193 + $0x28] sm:$0xff]
    %v1200 = vld [vmem:[%s1193 + $0x30] sm:$0xff]
    %v1201 = vld [vmem:[%s1193 + $0x38] sm:$0xff]
    %v1202 = vld [vmem:[%s1193 + $0x40] sm:$0xff]
    %v1203 = vld [vmem:[%s1193 + $0x48] sm:$0xff]
    %v1204 = vld [vmem:[%s1193 + $0x50] sm:$0xff]
    %v1205 = vld [vmem:[%s1193 + $0x58] sm:$0xff]
    %v1206 = vld [vmem:[%s1193 + $0x60] sm:$0xff]
    %v1207 = vld [vmem:[%s1193 + $0x68] sm:$0xff]
    %v1208 = vld [vmem:[%s1193 + $0x70] sm:$0xff]
    %v1209 = vld [vmem:[%s1193 + $0x78] sm:$0xff]
    %1210 = vmatprep.subr.mxu0 0.0
    %1211 = vmatpush1.msra.mxu0 %v1194
    %1212 = vmatprep.subr.mxu0 0.0
    %1213 = vmatpush1.msra.mxu0 %v1195
    %1214 = vmatprep.subr.mxu0 0.0
    %1215 = vmatpush1.msra.mxu0 %v1196
    %1216 = vmatprep.subr.mxu0 0.0
    %1217 = vmatpush1.msra.mxu0 %v1197
    %1218 = vmatprep.subr.mxu0 0.0
    %1219 = vmatpush1.msra.mxu0 %v1198
    %1220 = vmatprep.subr.mxu0 0.0
    %1221 = vmatpush1.msra.mxu0 %v1199
    %1222 = vmatprep.subr.mxu0 0.0
    %1223 = vmatpush1.msra.mxu0 %v1200
    %1224 = vmatprep.subr.mxu0 0.0
    %1225 = vmatpush1.msra.mxu0 %v1201
    %1226 = vmatprep.subr.mxu0 0.0
    %1227 = vmatpush1.msra.mxu0 %v1202
    %1228 = vmatprep.subr.mxu0 0.0
    %1229 = vmatpush1.msra.mxu0 %v1203
    %1230 = vmatprep.subr.mxu0 0.0
    %1231 = vmatpush1.msra.mxu0 %v1204
    %1232 = vmatprep.subr.mxu0 0.0
    %1233 = vmatpush1.msra.mxu0 %v1205
    %1234 = vmatprep.subr.mxu0 0.0
    %1235 = vmatpush1.msra.mxu0 %v1206
    %1236 = vmatprep.subr.mxu0 0.0
    %1237 = vmatpush1.msra.mxu0 %v1207
    %1238 = vmatprep.subr.mxu0 0.0
    %1239 = vmatpush1.msra.mxu0 %v1208
    %1240 = vmatprep.subr.mxu0 0.0
    %1241 = vmatpush1.msra.mxu0 %v1209
    %1242 = vmatprep.subr.mxu0 0.0
    %1243 = vmatpush1.msra.mxu0 0.0
    %1244 = vmatprep.subr.mxu0 0.0
    %1245 = vmatpush1.msra.mxu0 0.0
    %1246 = vmatprep.subr.mxu0 0.0
    %1247 = vmatpush1.msra.mxu0 0.0
    %1248 = vmatprep.subr.mxu0 0.0
    %1249 = vmatpush1.msra.mxu0 0.0
    %1250 = vmatprep.subr.mxu0 0.0
    %1251 = vmatpush1.msra.mxu0 0.0
    %1252 = vmatprep.subr.mxu0 0.0
    %1253 = vmatpush1.msra.mxu0 0.0
    %1254 = vmatprep.subr.mxu0 0.0
    %1255 = vmatpush1.msra.mxu0 0.0
    %1256 = vmatprep.subr.mxu0 0.0
    %1257 = vmatpush1.msra.mxu0 0.0
    %1258 = vmatprep.subr.mxu0 0.0
    %1259 = vmatpush1.msra.mxu0 0.0
    %1260 = vmatprep.subr.mxu0 0.0
    %1261 = vmatpush1.msra.mxu0 0.0
    %1262 = vmatprep.subr.mxu0 0.0
    %1263 = vmatpush1.msra.mxu0 0.0
    %1264 = vmatprep.subr.mxu0 0.0
    %1265 = vmatpush1.msra.mxu0 0.0
    %1266 = vmatprep.subr.mxu0 0.0
    %1267 = vmatpush1.msra.mxu0 0.0
    %1268 = vmatprep.subr.mxu0 0.0
    %1269 = vmatpush1.msra.mxu0 0.0
    %1270 = vmatprep.subr.mxu0 0.0
    %1271 = vmatpush1.msra.mxu0 0.0
    %1272 = vmatprep.subr.mxu0 0.0
    %1273 = vmatpush1.msra.mxu0 0.0
    %1274 = vmatprep.mubr.f32.mxu0 0.0
    %1275 = vmatmul.mubr.f32.gmra.mrb[0].mxu0 %v948
    %v1276 = vpop.f32.mrb[0].mxu0
    %v1277 = vadd.f32 0.0, %v1276
    %v1278 = vpop.f32.mrb[0].mxu0
    %1279 = vmatprep.mubr.f32.mxu0 0.0
    %1280 = vmatmul.mubr.f32.gmra.mrb[0].mxu0 %v949
    %v1281 = vpop.f32.mrb[0].mxu0
    %v1282 = vadd.f32 0.0, %v1281
    %v1283 = vpop.f32.mrb[0].mxu0
    %1284 = vdwg.mxu0
    %v1285 = vadd.f32 %v1191, %v1277
    %v1286 = vadd.f32 %v1192, %v1282
    %s1287 = scalar_lea.vmem [#allocation8], 256
    %v1288 = vld [vmem:[%s1287] sm:$0xff]
    %v1289 = vld [vmem:[%s1287 + $0x8] sm:$0xff]
    %v1290 = vld [vmem:[%s1287 + $0x10] sm:$0xff]
    %v1291 = vld [vmem:[%s1287 + $0x18] sm:$0xff]
    %v1292 = vld [vmem:[%s1287 + $0x20] sm:$0xff]
    %v1293 = vld [vmem:[%s1287 + $0x28] sm:$0xff]
    %v1294 = vld [vmem:[%s1287 + $0x30] sm:$0xff]
    %v1295 = vld [vmem:[%s1287 + $0x38] sm:$0xff]
    %v1296 = vld [vmem:[%s1287 + $0x40] sm:$0xff]
    %v1297 = vld [vmem:[%s1287 + $0x48] sm:$0xff]
    %v1298 = vld [vmem:[%s1287 + $0x50] sm:$0xff]
    %v1299 = vld [vmem:[%s1287 + $0x58] sm:$0xff]
    %v1300 = vld [vmem:[%s1287 + $0x60] sm:$0xff]
    %v1301 = vld [vmem:[%s1287 + $0x68] sm:$0xff]
    %v1302 = vld [vmem:[%s1287 + $0x70] sm:$0xff]
    %v1303 = vld [vmem:[%s1287 + $0x78] sm:$0xff]
    %1304 = vmatprep.subr.mxu0 0.0
    %1305 = vmatpush1.msra.mxu0 %v1288
    %1306 = vmatprep.subr.mxu0 0.0
    %1307 = vmatpush1.msra.mxu0 %v1289
    %1308 = vmatprep.subr.mxu0 0.0
    %1309 = vmatpush1.msra.mxu0 %v1290
    %1310 = vmatprep.subr.mxu0 0.0
    %1311 = vmatpush1.msra.mxu0 %v1291
    %1312 = vmatprep.subr.mxu0 0.0
    %1313 = vmatpush1.msra.mxu0 %v1292
    %1314 = vmatprep.subr.mxu0 0.0
    %1315 = vmatpush1.msra.mxu0 %v1293
    %1316 = vmatprep.subr.mxu0 0.0
    %1317 = vmatpush1.msra.mxu0 %v1294
    %1318 = vmatprep.subr.mxu0 0.0
    %1319 = vmatpush1.msra.mxu0 %v1295
    %1320 = vmatprep.subr.mxu0 0.0
    %1321 = vmatpush1.msra.mxu0 %v1296
    %1322 = vmatprep.subr.mxu0 0.0
    %1323 = vmatpush1.msra.mxu0 %v1297
    %1324 = vmatprep.subr.mxu0 0.0
    %1325 = vmatpush1.msra.mxu0 %v1298
    %1326 = vmatprep.subr.mxu0 0.0
    %1327 = vmatpush1.msra.mxu0 %v1299
    %1328 = vmatprep.subr.mxu0 0.0
    %1329 = vmatpush1.msra.mxu0 %v1300
    %1330 = vmatprep.subr.mxu0 0.0
    %1331 = vmatpush1.msra.mxu0 %v1301
    %1332 = vmatprep.subr.mxu0 0.0
    %1333 = vmatpush1.msra.mxu0 %v1302
    %1334 = vmatprep.subr.mxu0 0.0
    %1335 = vmatpush1.msra.mxu0 %v1303
    %1336 = vmatprep.subr.mxu0 0.0
    %1337 = vmatpush1.msra.mxu0 0.0
    %1338 = vmatprep.subr.mxu0 0.0
    %1339 = vmatpush1.msra.mxu0 0.0
    %1340 = vmatprep.subr.mxu0 0.0
    %1341 = vmatpush1.msra.mxu0 0.0
    %1342 = vmatprep.subr.mxu0 0.0
    %1343 = vmatpush1.msra.mxu0 0.0
    %1344 = vmatprep.subr.mxu0 0.0
    %1345 = vmatpush1.msra.mxu0 0.0
    %1346 = vmatprep.subr.mxu0 0.0
    %1347 = vmatpush1.msra.mxu0 0.0
    %1348 = vmatprep.subr.mxu0 0.0
    %1349 = vmatpush1.msra.mxu0 0.0
    %1350 = vmatprep.subr.mxu0 0.0
    %1351 = vmatpush1.msra.mxu0 0.0
    %1352 = vmatprep.subr.mxu0 0.0
    %1353 = vmatpush1.msra.mxu0 0.0
    %1354 = vmatprep.subr.mxu0 0.0
    %1355 = vmatpush1.msra.mxu0 0.0
    %1356 = vmatprep.subr.mxu0 0.0
    %1357 = vmatpush1.msra.mxu0 0.0
    %1358 = vmatprep.subr.mxu0 0.0
    %1359 = vmatpush1.msra.mxu0 0.0
    %1360 = vmatprep.subr.mxu0 0.0
    %1361 = vmatpush1.msra.mxu0 0.0
    %1362 = vmatprep.subr.mxu0 0.0
    %1363 = vmatpush1.msra.mxu0 0.0
    %1364 = vmatprep.subr.mxu0 0.0
    %1365 = vmatpush1.msra.mxu0 0.0
    %1366 = vmatprep.subr.mxu0 0.0
    %1367 = vmatpush1.msra.mxu0 0.0
    %1368 = vmatprep.mubr.f32.mxu0 0.0
    %1369 = vmatmul.mubr.f32.gmra.mrb[0].mxu0 %v1092
    %v1370 = vpop.f32.mrb[0].mxu0
    %v1371 = vadd.f32 0.0, %v1370
    %v1372 = vpop.f32.mrb[0].mxu0
    %1373 = vmatprep.mubr.f32.mxu0 0.0
    %1374 = vmatmul.mubr.f32.gmra.mrb[0].mxu0 %v1097
    %v1375 = vpop.f32.mrb[0].mxu0
    %v1376 = vadd.f32 0.0, %v1375
    %v1377 = vpop.f32.mrb[0].mxu0
    %1378 = vdwg.mxu0
    %v1379 = vadd.f32 %v1285, %v1371
    %v1380 = vadd.f32 %v1286, %v1376
    %1381 = vst [vmem:[#allocation10] sm:$0xff] %v1379
    %1382 = vst [vmem:[#allocation10 + $0x8] sm:$0xff] %v1380
    // Predicated region
    $region50: #{tpu_custom_call.1} parent=1 // pred_check
      _
    $region51: #{tpu_custom_call.1} parent=1 // pred_check_branch
      %1384 = sbr.rel (0) target = $region53
    $region52: #{tpu_custom_call.1} parent=1 // pred_region
      %s1386 = ssub.s32 256, 256
      %1387 = vsyncadd [#allocation4], %s1386
      %s1388 = sshll.u32 [#allocation10], 4
      %s1389 = int_to_ptr.vmem [resolvable:$true] %s1388
      %1394 = dma.vmem_to_hbm [thread:$0]  %s1389, 256, %s8, [#allocation4], 128, 128, 8
    $region53: #{tpu_custom_call.1} parent=1 // pred_fallthru
      _
    // Predicated region
    $region54: #{tpu_custom_call.1} parent=1 // pred_check
      _
    $region55: #{tpu_custom_call.1} parent=1 // pred_check_branch
      %1396 = sbr.rel (0) target = $region57
    $region56: #{tpu_custom_call.1} parent=1 // pred_region
      %1397 = dma.done [#allocation4], 256
    $region57: #{tpu_custom_call.1} parent=1 // pred_fallthru
      _
    %1398 = vsyncpa [#allocation3], 1
    %1399 = vsyncpa [#allocation6], 1
    %1400 = vsyncpa [#allocation9], 1
    %1401 = vsyncpa [#allocation4], 1

</llo_original>
